<compile_context>
chip_gen: v7x
topology: tpu7x:2x2x1
jax: 0.10.0
libtpu: 0.0.40
codegen_flags: <defaults>
</compile_context>

<pallas_src>
import jax
import jax.numpy as jnp
from jax import lax
from jax.experimental import pallas as pl
from jax.experimental.pallas import tpu as pltpu

C1, C2, C3, F1, F2 = 30, 50, 50, 20, 2   # conv1/conv2/conv3/fc1/fc2 widths
KS = 3                                   # Conv1d kernel size (padding=1)


def make_kernel(cardinalities):
    """Fused forward kernel for a fixed set of one-hot widths (closure)."""
    cards = tuple(int(c) for c in cardinalities)
    total_card = sum(cards)

    def kernel(x_ref, idx_ref,
               cw1_ref, cb1_ref, cw2_ref, cb2_ref, cw3_ref, cb3_ref,
               wf1_ref, bf1_ref, wf2_ref, bf2_ref, out_ref):
        Bt, S, R = x_ref.shape
        BS = Bt * S
        n_oh = idx_ref.shape[-1]

        # Rows are batch-major flattened; S is a multiple of 8 in practice so
        # this reshape is a free sublane regroup (comment per review: if S is
        # ever not 8-aligned this becomes a relayout copy, still correct).
        xf = x_ref[...].reshape(BS, R)
        idx = idx_ref[...].reshape(BS, n_oh)

        # ---- fused OnehotEmbedding: ONE full-width iota, offset compares.
        # TODO(synk): OnehotEmbedding internals are not given; assumed plain
        # one-hot encoding of each categorical, concatenated after x.
        lanes = lax.broadcasted_iota(jnp.int32, (BS, total_card), 1)
        oh = jnp.zeros((BS, total_card), jnp.float32)
        off = 0
        for j, card in enumerate(cards):
            oh = oh + (lanes == (idx[:, j:j + 1] + off)).astype(jnp.float32)
            off += card
        h = jnp.concatenate([xf, oh], axis=-1)            # (BS, Cin) f32

        # per-row sequence position (masks zero padding AND the cross-batch
        # wraparound introduced by the circular rolls below)
        s_id = lax.broadcasted_iota(jnp.int32, (Bt, S, 1), 1).reshape(BS, 1)
        is_first = s_id == 0
        is_last = s_id == S - 1

        def conv_tanh(hf, w_ref, b_ref):
            # Conv1d(k=3, padding=1) as THREE accumulating per-tap dots
            # (no unaligned lane concat); shifts are XLU sublane rolls.
            prv = jnp.where(is_first, 0.0, pltpu.roll(hf, 1, 0))        # x[s-1]
            nxt = jnp.where(is_last, 0.0, pltpu.roll(hf, BS - 1, 0))    # x[s+1]
            y = jnp.dot(prv.astype(jnp.bfloat16), w_ref[0],
                        preferred_element_type=jnp.float32)
            y = y + jnp.dot(hf.astype(jnp.bfloat16), w_ref[1],
                            preferred_element_type=jnp.float32)
            y = y + jnp.dot(nxt.astype(jnp.bfloat16), w_ref[2],
                            preferred_element_type=jnp.float32)
            return jnp.tanh(y + b_ref[...])               # f32 elementwise

        h = conv_tanh(h, cw1_ref, cb1_ref)                # (BS, 30)
        h = conv_tanh(h, cw2_ref, cb2_ref)                # (BS, 50)
        h = conv_tanh(h, cw3_ref, cb3_ref)                # (BS, 50)

        # AdaptiveMaxPool1d(1) over the sequence axis + flatten(1, -1)
        pooled = jnp.max(h.reshape(Bt, S, C3), axis=1)    # (Bt, 50)

        # fc1 -> tanh -> fc2 -> tanh (bf16 operands, f32 accumulate)
        z = jnp.tanh(jnp.dot(pooled.astype(jnp.bfloat16), wf1_ref[...],
                             preferred_element_type=jnp.float32) + bf1_ref[...])
        o = jnp.tanh(jnp.dot(z.astype(jnp.bfloat16), wf2_ref[...],
                             preferred_element_type=jnp.float32) + bf2_ref[...])

        # log_softmax(dim=1), max-stabilized, f32 throughout
        m = jnp.max(o, axis=1, keepdims=True)
        lse = m + jnp.log(jnp.sum(jnp.exp(o - m), axis=1, keepdims=True))
        out_ref[...] = o - lse

    return kernel


def _chip_budget():
    """(vmem_limit_bytes, target_rows) per TPU generation."""
    try:
        kind = jax.devices()[0].device_kind.lower()
    except Exception:
        kind = ""
    if ("v5" in kind) or ("v6" in kind) or ("v4" in kind):
        # 128 MiB physical VMEM: big tiles, generous scoped budget.
        return 96 * 1024 * 1024, 4096
    # v7x (64 MiB VMEM / TC) or unknown: be conservative; v7x has ~2.3x HBM BW
    # so the slightly smaller tiles cost little.
    return 44 * 1024 * 1024, 2048


def _pick_b_tile(B, S, target_rows):
    """Batch tile: multiple of 8, <= target_rows/S, and keep >=2 grid steps
    when the batch allows it (v7x megacore).  Never falls back to b_tile=B."""
    limit = max(8, (target_rows // max(S, 1)) // 8 * 8)
    if B >= 2 * limit:
        return limit
    if B >= 16:
        half = max(8, (B // 2) // 8 * 8)
        return min(limit, half)
    return 8


def _resident_spec(arr):
    """Full-array block with a constant block index: DMA'd once, stays in VMEM."""
    zeros = (0,) * arr.ndim
    return pl.BlockSpec(arr.shape, lambda b, _z=zeros: _z)


def cnn_all_forward(x, onehot_idx, cardinalities, params, *, b_tile=None):
    """x: (B, S, R) float32; onehot_idx: (B, S, num_onehots) int32 -> (B, 2)."""
    B, S, R = x.shape
    n_oh = onehot_idx.shape[-1]
    vmem_limit, target_rows = _chip_budget()
    if b_tile is None:
        b_tile = _pick_b_tile(B, S, target_rows)
    assert b_tile % 8 == 0, "b_tile must be a multiple of 8"

    # Pad the batch to a multiple of b_tile (padded rows are sliced off).
    B_pad = pl.cdiv(B, b_tile) * b_tile
    if B_pad != B:
        x = jnp.pad(x, ((0, B_pad - B), (0, 0), (0, 0)))
        onehot_idx = jnp.pad(onehot_idx, ((0, B_pad - B), (0, 0), (0, 0)))

    # Weights -> bf16 once (MXU-native operands); biases stay f32.
    kparams = tuple(
        p.astype(jnp.bfloat16) if i % 2 == 0 else p.astype(jnp.float32)
        for i, p in enumerate(params))

    grid = (B_pad // b_tile,)
    x_spec = pl.BlockSpec((b_tile, S, R), lambda b: (b, 0, 0))
    idx_spec = pl.BlockSpec((b_tile, S, n_oh), lambda b: (b, 0, 0))
    w_specs = [_resident_spec(p) for p in kparams]
    out_spec = pl.BlockSpec((b_tile, F2), lambda b: (b, 0))

    out = pl.pallas_call(
        make_kernel(cardinalities),
        out_shape=jax.ShapeDtypeStruct((B_pad, F2), jnp.float32),
        grid=grid,
        in_specs=[x_spec, idx_spec] + w_specs,
        out_specs=out_spec,
        compiler_params=pltpu.CompilerParams(
            # batch tiles are independent -> megacore-shard on v7x
            # TODO(synk): if "parallel" does not split across v7x's 2 TCs,
            # switch this axis to pltpu.CORE_PARALLEL.
            dimension_semantics=("parallel",),
            vmem_limit_bytes=vmem_limit),
    )(x, onehot_idx, *kparams)
    return out[:B]


def make_params(key, cin):
    """Deterministic init mirroring the PyTorch layer shapes.
    Conv weights stored per-tap as (KS, Cin, Cout) == torch (Cout, Cin, K)
    transposed; FC weights as (in, out) == torch weight.T; biases as (1, out)."""
    def u(k, shape, fan_in):
        b = 1.0 / jnp.sqrt(jnp.float32(fan_in))
        return jax.random.uniform(k, shape, jnp.float32, -b, b)

    ks = jax.random.split(key, 10)
    return (
        u(ks[0], (KS, cin, C1), cin * KS), u(ks[1], (1, C1), cin * KS),   # conv1
        u(ks[2], (KS, C1, C2), C1 * KS),   u(ks[3], (1, C2), C1 * KS),    # conv2
        u(ks[4], (KS, C2, C3), C2 * KS),   u(ks[5], (1, C3), C2 * KS),    # conv3
        u(ks[6], (C3, F1), C3),            u(ks[7], (1, F1), C3),         # fc1
        u(ks[8], (F1, F2), F1),            u(ks[9], (1, F2), F1),         # fc2
    )


def reference_forward(x, onehot_idx, cardinalities, params):
    """Pure-JAX reference (XLA convs, f32) for a numerical sanity check."""
    w1, b1, w2, b2, w3, b3, wf1, bf1, wf2, bf2 = params
    feats = [x] + [jax.nn.one_hot(onehot_idx[..., j], c, dtype=jnp.float32)
                   for j, c in enumerate(cardinalities)]
    h = jnp.concatenate(feats, axis=-1)
    dn = ('NWC', 'WIO', 'NWC')
    h = jnp.tanh(lax.conv_general_dilated(h, w1, (1,), 'SAME', dimension_numbers=dn) + b1[0])
    h = jnp.tanh(lax.conv_general_dilated(h, w2, (1,), 'SAME', dimension_numbers=dn) + b2[0])
    h = jnp.tanh(lax.conv_general_dilated(h, w3, (1,), 'SAME', dimension_numbers=dn) + b3[0])
    p = jnp.max(h, axis=1)
    p = jnp.tanh(p @ wf1 + bf1[0])
    p = jnp.tanh(p @ wf2 + bf2[0])
    return jax.nn.log_softmax(p, axis=1)


if __name__ == "__main__":
    key = jax.random.PRNGKey(0)
    B, S, R = 16, 8, 4                # batch, sequence, input_record_width
    cards = (5, 3)                    # two categorical ("onehot") features
    cin = R + sum(cards)              # conv1 input channels

    kx, koh, kp = jax.random.split(key, 3)
    x = jax.random.normal(kx, (B, S, R), jnp.float32)
    onehot_idx = jnp.stack(
        [jax.random.randint(jax.random.fold_in(koh, j), (B, S), 0, c)
         for j, c in enumerate(cards)], axis=-1).astype(jnp.int32)
    params = make_params(kp, cin)

    # Auto-picked b_tile=8 -> 2-step batch grid at this small demo size:
    # exercises BlockSpec pipelining and the "parallel" sharding on v7x.
    out = cnn_all_forward(x, onehot_idx, cards, params)
    out = jax.block_until_ready(out)
    assert out.shape == (B, F2)

    # Reference uses the same bf16-rounded weights so the check validates the
    # kernel math (not weight quantization); remaining diff is the bf16
    # activation casts at the dot boundaries.
    ref_params = tuple(
        p.astype(jnp.bfloat16).astype(jnp.float32) if i % 2 == 0 else p
        for i, p in enumerate(params))
    ref = reference_forward(x, onehot_idx, cards, ref_params)
    if not jnp.allclose(out, ref, atol=2e-2, rtol=2e-2):
        raise AssertionError("Pallas kernel output mismatches JAX reference")

    print("KERNEL_OK")
</pallas_src>

<mosaic_0001>
module attributes {stable_mosaic.version = 11 : i64} {
  func.func @kernel(%arg0: i32, %arg1: memref<8x8x4xf32, #tpu.memory_space<vmem>>, %arg2: memref<8x8x2xi32, #tpu.memory_space<vmem>>, %arg3: memref<3x12x30xbf16, #tpu.memory_space<vmem>>, %arg4: memref<1x30xf32, #tpu.memory_space<vmem>>, %arg5: memref<3x30x50xbf16, #tpu.memory_space<vmem>>, %arg6: memref<1x50xf32, #tpu.memory_space<vmem>>, %arg7: memref<3x50x50xbf16, #tpu.memory_space<vmem>>, %arg8: memref<1x50xf32, #tpu.memory_space<vmem>>, %arg9: memref<50x20xbf16, #tpu.memory_space<vmem>>, %arg10: memref<1x20xf32, #tpu.memory_space<vmem>>, %arg11: memref<20x2xbf16, #tpu.memory_space<vmem>>, %arg12: memref<1x2xf32, #tpu.memory_space<vmem>>, %arg13: memref<8x2xf32, #tpu.memory_space<vmem>>) attributes {dimension_semantics = [#tpu.dimension_semantics<parallel>], iteration_bounds = array<i64: 2>, scalar_prefetch = 0 : i64, scratch_operands = 0 : i64, tpu.core_type = #tpu.core_type<tc>, window_params = [{transform_indices = @transform_0, window_bounds = array<i64: 8, 8, 4>}, {transform_indices = @transform_1, window_bounds = array<i64: 8, 8, 2>}, {pipeline_mode = #tpu.pipeline_mode<synchronous>, transform_indices = @transform_2, window_bounds = array<i64: 3, 12, 30>}, {pipeline_mode = #tpu.pipeline_mode<synchronous>, transform_indices = @transform_3, window_bounds = array<i64: 1, 30>}, {pipeline_mode = #tpu.pipeline_mode<synchronous>, transform_indices = @transform_4, window_bounds = array<i64: 3, 30, 50>}, {pipeline_mode = #tpu.pipeline_mode<synchronous>, transform_indices = @transform_5, window_bounds = array<i64: 1, 50>}, {pipeline_mode = #tpu.pipeline_mode<synchronous>, transform_indices = @transform_6, window_bounds = array<i64: 3, 50, 50>}, {pipeline_mode = #tpu.pipeline_mode<synchronous>, transform_indices = @transform_7, window_bounds = array<i64: 1, 50>}, {pipeline_mode = #tpu.pipeline_mode<synchronous>, transform_indices = @transform_8, window_bounds = array<i64: 50, 20>}, {pipeline_mode = #tpu.pipeline_mode<synchronous>, transform_indices = @transform_9, window_bounds = array<i64: 1, 20>}, {pipeline_mode = #tpu.pipeline_mode<synchronous>, transform_indices = @transform_10, window_bounds = array<i64: 20, 2>}, {pipeline_mode = #tpu.pipeline_mode<synchronous>, transform_indices = @transform_11, window_bounds = array<i64: 1, 2>}, {transform_indices = @transform_12, window_bounds = array<i64: 8, 2>}]} {
    %c0 = arith.constant 0 : index
    %c0_0 = arith.constant 0 : index
    %c0_1 = arith.constant 0 : index
    %0 = vector.load %arg1[%c0, %c0_0, %c0_1] : memref<8x8x4xf32, #tpu.memory_space<vmem>>, vector<8x8x4xf32>
    %1 = vector.shape_cast %0 : vector<8x8x4xf32> to vector<64x4xf32>
    %c0_2 = arith.constant 0 : index
    %c0_3 = arith.constant 0 : index
    %c0_4 = arith.constant 0 : index
    %2 = vector.load %arg2[%c0_2, %c0_3, %c0_4] : memref<8x8x2xi32, #tpu.memory_space<vmem>>, vector<8x8x2xi32>
    %3 = vector.shape_cast %2 : vector<8x8x2xi32> to vector<64x2xi32>
    %4 = tpu.iota {dimensions = array<i32: 1>} : vector<64x8xi32>
    %cst = arith.constant 0.000000e+00 : f32
    %5 = vector.broadcast %cst : f32 to vector<64x8xf32>
    %6 = vector.extract_strided_slice %3 {offsets = [0, 0], sizes = [64, 1], strides = [1, 1]} : vector<64x2xi32> to vector<64x1xi32>
    %c0_i32 = arith.constant 0 : i32
    %7 = vector.broadcast %c0_i32 : i32 to vector<64x1xi32>
    %8 = arith.addi %6, %7 : vector<64x1xi32>
    %9 = vector.broadcast %8 : vector<64x1xi32> to vector<64x8xi32>
    %10 = arith.cmpi eq, %4, %9 : vector<64x8xi32>
    %11 = arith.extui %10 : vector<64x8xi1> to vector<64x8xi32>
    %12 = arith.sitofp %11 : vector<64x8xi32> to vector<64x8xf32>
    %13 = arith.addf %5, %12 : vector<64x8xf32>
    %14 = vector.extract_strided_slice %3 {offsets = [0, 1], sizes = [64, 1], strides = [1, 1]} : vector<64x2xi32> to vector<64x1xi32>
    %c5_i32 = arith.constant 5 : i32
    %15 = vector.broadcast %c5_i32 : i32 to vector<64x1xi32>
    %16 = arith.addi %14, %15 : vector<64x1xi32>
    %17 = vector.broadcast %16 : vector<64x1xi32> to vector<64x8xi32>
    %18 = arith.cmpi eq, %4, %17 : vector<64x8xi32>
    %19 = arith.extui %18 : vector<64x8xi1> to vector<64x8xi32>
    %20 = arith.sitofp %19 : vector<64x8xi32> to vector<64x8xf32>
    %21 = arith.addf %13, %20 : vector<64x8xf32>
    %22 = tpu.concatenate %1, %21 in 1 : vector<64x4xf32>, vector<64x8xf32> -> vector<64x12xf32>
    %23 = tpu.iota {dimensions = array<i32: 1>} : vector<8x8x1xi32>
    %24 = vector.shape_cast %23 : vector<8x8x1xi32> to vector<64x1xi32>
    %c0_i32_5 = arith.constant 0 : i32
    %25 = vector.broadcast %c0_i32_5 : i32 to vector<64x1xi32>
    %26 = arith.cmpi eq, %24, %25 : vector<64x1xi32>
    %c7_i32 = arith.constant 7 : i32
    %27 = vector.broadcast %c7_i32 : i32 to vector<64x1xi32>
    %28 = arith.cmpi eq, %24, %27 : vector<64x1xi32>
    %c1_i32 = arith.constant 1 : i32
    %29 = tpu.dynamic_rotate %22 by %c1_i32 dim 0 : vector<64x12xf32>, i32 -> vector<64x12xf32>
    %cst_6 = arith.constant 0.000000e+00 : f32
    %30 = vector.shape_cast %26 : vector<64x1xi1> to vector<64x1xi1>
    %31 = vector.broadcast %30 : vector<64x1xi1> to vector<64x12xi1>
    %32 = vector.broadcast %cst_6 : f32 to vector<64x12xf32>
    %33 = arith.select %31, %32, %29 : vector<64x12xi1>, vector<64x12xf32>
    %c63_i32 = arith.constant 63 : i32
    %34 = tpu.dynamic_rotate %22 by %c63_i32 dim 0 : vector<64x12xf32>, i32 -> vector<64x12xf32>
    %cst_7 = arith.constant 0.000000e+00 : f32
    %35 = vector.shape_cast %28 : vector<64x1xi1> to vector<64x1xi1>
    %36 = vector.broadcast %35 : vector<64x1xi1> to vector<64x12xi1>
    %37 = vector.broadcast %cst_7 : f32 to vector<64x12xf32>
    %38 = arith.select %36, %37, %34 : vector<64x12xi1>, vector<64x12xf32>
    %39 = arith.truncf %33 : vector<64x12xf32> to vector<64x12xbf16>
    %c0_8 = arith.constant 0 : index
    %c0_9 = arith.constant 0 : index
    %c0_10 = arith.constant 0 : index
    %40 = vector.load %arg3[%c0_8, %c0_9, %c0_10] : memref<3x12x30xbf16, #tpu.memory_space<vmem>>, vector<1x12x30xbf16>
    %41 = vector.shape_cast %40 : vector<1x12x30xbf16> to vector<12x30xbf16>
    %cst_11 = arith.constant dense<0.000000e+00> : vector<64x30xf32>
    %42 = tpu.matmul %39, %41, %cst_11 {dimension_numbers = #tpu.dot_dimension_numbers<[1], [0], [0], [1], [0, 0, 1, 1], [], []>} : vector<64x12xbf16>, vector<12x30xbf16>, vector<64x30xf32> -> vector<64x30xf32>
    %43 = arith.truncf %22 : vector<64x12xf32> to vector<64x12xbf16>
    %c1 = arith.constant 1 : index
    %c0_12 = arith.constant 0 : index
    %c0_13 = arith.constant 0 : index
    %44 = vector.load %arg3[%c1, %c0_12, %c0_13] : memref<3x12x30xbf16, #tpu.memory_space<vmem>>, vector<1x12x30xbf16>
    %45 = vector.shape_cast %44 : vector<1x12x30xbf16> to vector<12x30xbf16>
    %cst_14 = arith.constant dense<0.000000e+00> : vector<64x30xf32>
    %46 = tpu.matmul %43, %45, %cst_14 {dimension_numbers = #tpu.dot_dimension_numbers<[1], [0], [0], [1], [0, 0, 1, 1], [], []>} : vector<64x12xbf16>, vector<12x30xbf16>, vector<64x30xf32> -> vector<64x30xf32>
    %47 = arith.addf %42, %46 : vector<64x30xf32>
    %48 = arith.truncf %38 : vector<64x12xf32> to vector<64x12xbf16>
    %c2 = arith.constant 2 : index
    %c0_15 = arith.constant 0 : index
    %c0_16 = arith.constant 0 : index
    %49 = vector.load %arg3[%c2, %c0_15, %c0_16] : memref<3x12x30xbf16, #tpu.memory_space<vmem>>, vector<1x12x30xbf16>
    %50 = vector.shape_cast %49 : vector<1x12x30xbf16> to vector<12x30xbf16>
    %cst_17 = arith.constant dense<0.000000e+00> : vector<64x30xf32>
    %51 = tpu.matmul %48, %50, %cst_17 {dimension_numbers = #tpu.dot_dimension_numbers<[1], [0], [0], [1], [0, 0, 1, 1], [], []>} : vector<64x12xbf16>, vector<12x30xbf16>, vector<64x30xf32> -> vector<64x30xf32>
    %52 = arith.addf %47, %51 : vector<64x30xf32>
    %c0_18 = arith.constant 0 : index
    %c0_19 = arith.constant 0 : index
    %53 = vector.load %arg4[%c0_18, %c0_19] : memref<1x30xf32, #tpu.memory_space<vmem>>, vector<1x30xf32>
    %54 = vector.broadcast %53 : vector<1x30xf32> to vector<64x30xf32>
    %55 = arith.addf %52, %54 : vector<64x30xf32>
    %56 = math.tanh %55 : vector<64x30xf32>
    %c1_i32_20 = arith.constant 1 : i32
    %57 = tpu.dynamic_rotate %56 by %c1_i32_20 dim 0 : vector<64x30xf32>, i32 -> vector<64x30xf32>
    %cst_21 = arith.constant 0.000000e+00 : f32
    %58 = vector.shape_cast %26 : vector<64x1xi1> to vector<64x1xi1>
    %59 = vector.broadcast %58 : vector<64x1xi1> to vector<64x30xi1>
    %60 = vector.broadcast %cst_21 : f32 to vector<64x30xf32>
    %61 = arith.select %59, %60, %57 : vector<64x30xi1>, vector<64x30xf32>
    %c63_i32_22 = arith.constant 63 : i32
    %62 = tpu.dynamic_rotate %56 by %c63_i32_22 dim 0 : vector<64x30xf32>, i32 -> vector<64x30xf32>
    %cst_23 = arith.constant 0.000000e+00 : f32
    %63 = vector.shape_cast %28 : vector<64x1xi1> to vector<64x1xi1>
    %64 = vector.broadcast %63 : vector<64x1xi1> to vector<64x30xi1>
    %65 = vector.broadcast %cst_23 : f32 to vector<64x30xf32>
    %66 = arith.select %64, %65, %62 : vector<64x30xi1>, vector<64x30xf32>
    %67 = arith.truncf %61 : vector<64x30xf32> to vector<64x30xbf16>
    %c0_24 = arith.constant 0 : index
    %c0_25 = arith.constant 0 : index
    %c0_26 = arith.constant 0 : index
    %68 = vector.load %arg5[%c0_24, %c0_25, %c0_26] : memref<3x30x50xbf16, #tpu.memory_space<vmem>>, vector<1x30x50xbf16>
    %69 = vector.shape_cast %68 : vector<1x30x50xbf16> to vector<30x50xbf16>
    %cst_27 = arith.constant dense<0.000000e+00> : vector<64x50xf32>
    %70 = tpu.matmul %67, %69, %cst_27 {dimension_numbers = #tpu.dot_dimension_numbers<[1], [0], [0], [1], [0, 0, 1, 1], [], []>} : vector<64x30xbf16>, vector<30x50xbf16>, vector<64x50xf32> -> vector<64x50xf32>
    %71 = arith.truncf %56 : vector<64x30xf32> to vector<64x30xbf16>
    %c1_28 = arith.constant 1 : index
    %c0_29 = arith.constant 0 : index
    %c0_30 = arith.constant 0 : index
    %72 = vector.load %arg5[%c1_28, %c0_29, %c0_30] : memref<3x30x50xbf16, #tpu.memory_space<vmem>>, vector<1x30x50xbf16>
    %73 = vector.shape_cast %72 : vector<1x30x50xbf16> to vector<30x50xbf16>
    %cst_31 = arith.constant dense<0.000000e+00> : vector<64x50xf32>
    %74 = tpu.matmul %71, %73, %cst_31 {dimension_numbers = #tpu.dot_dimension_numbers<[1], [0], [0], [1], [0, 0, 1, 1], [], []>} : vector<64x30xbf16>, vector<30x50xbf16>, vector<64x50xf32> -> vector<64x50xf32>
    %75 = arith.addf %70, %74 : vector<64x50xf32>
    %76 = arith.truncf %66 : vector<64x30xf32> to vector<64x30xbf16>
    %c2_32 = arith.constant 2 : index
    %c0_33 = arith.constant 0 : index
    %c0_34 = arith.constant 0 : index
    %77 = vector.load %arg5[%c2_32, %c0_33, %c0_34] : memref<3x30x50xbf16, #tpu.memory_space<vmem>>, vector<1x30x50xbf16>
    %78 = vector.shape_cast %77 : vector<1x30x50xbf16> to vector<30x50xbf16>
    %cst_35 = arith.constant dense<0.000000e+00> : vector<64x50xf32>
    %79 = tpu.matmul %76, %78, %cst_35 {dimension_numbers = #tpu.dot_dimension_numbers<[1], [0], [0], [1], [0, 0, 1, 1], [], []>} : vector<64x30xbf16>, vector<30x50xbf16>, vector<64x50xf32> -> vector<64x50xf32>
    %80 = arith.addf %75, %79 : vector<64x50xf32>
    %c0_36 = arith.constant 0 : index
    %c0_37 = arith.constant 0 : index
    %81 = vector.load %arg6[%c0_36, %c0_37] : memref<1x50xf32, #tpu.memory_space<vmem>>, vector<1x50xf32>
    %82 = vector.broadcast %81 : vector<1x50xf32> to vector<64x50xf32>
    %83 = arith.addf %80, %82 : vector<64x50xf32>
    %84 = math.tanh %83 : vector<64x50xf32>
    %c1_i32_38 = arith.constant 1 : i32
    %85 = tpu.dynamic_rotate %84 by %c1_i32_38 dim 0 : vector<64x50xf32>, i32 -> vector<64x50xf32>
    %cst_39 = arith.constant 0.000000e+00 : f32
    %86 = vector.shape_cast %26 : vector<64x1xi1> to vector<64x1xi1>
    %87 = vector.broadcast %86 : vector<64x1xi1> to vector<64x50xi1>
    %88 = vector.broadcast %cst_39 : f32 to vector<64x50xf32>
    %89 = arith.select %87, %88, %85 : vector<64x50xi1>, vector<64x50xf32>
    %c63_i32_40 = arith.constant 63 : i32
    %90 = tpu.dynamic_rotate %84 by %c63_i32_40 dim 0 : vector<64x50xf32>, i32 -> vector<64x50xf32>
    %cst_41 = arith.constant 0.000000e+00 : f32
    %91 = vector.shape_cast %28 : vector<64x1xi1> to vector<64x1xi1>
    %92 = vector.broadcast %91 : vector<64x1xi1> to vector<64x50xi1>
    %93 = vector.broadcast %cst_41 : f32 to vector<64x50xf32>
    %94 = arith.select %92, %93, %90 : vector<64x50xi1>, vector<64x50xf32>
    %95 = arith.truncf %89 : vector<64x50xf32> to vector<64x50xbf16>
    %c0_42 = arith.constant 0 : index
    %c0_43 = arith.constant 0 : index
    %c0_44 = arith.constant 0 : index
    %96 = vector.load %arg7[%c0_42, %c0_43, %c0_44] : memref<3x50x50xbf16, #tpu.memory_space<vmem>>, vector<1x50x50xbf16>
    %97 = vector.shape_cast %96 : vector<1x50x50xbf16> to vector<50x50xbf16>
    %cst_45 = arith.constant dense<0.000000e+00> : vector<64x50xf32>
    %98 = tpu.matmul %95, %97, %cst_45 {dimension_numbers = #tpu.dot_dimension_numbers<[1], [0], [0], [1], [0, 0, 1, 1], [], []>} : vector<64x50xbf16>, vector<50x50xbf16>, vector<64x50xf32> -> vector<64x50xf32>
    %99 = arith.truncf %84 : vector<64x50xf32> to vector<64x50xbf16>
    %c1_46 = arith.constant 1 : index
    %c0_47 = arith.constant 0 : index
    %c0_48 = arith.constant 0 : index
    %100 = vector.load %arg7[%c1_46, %c0_47, %c0_48] : memref<3x50x50xbf16, #tpu.memory_space<vmem>>, vector<1x50x50xbf16>
    %101 = vector.shape_cast %100 : vector<1x50x50xbf16> to vector<50x50xbf16>
    %cst_49 = arith.constant dense<0.000000e+00> : vector<64x50xf32>
    %102 = tpu.matmul %99, %101, %cst_49 {dimension_numbers = #tpu.dot_dimension_numbers<[1], [0], [0], [1], [0, 0, 1, 1], [], []>} : vector<64x50xbf16>, vector<50x50xbf16>, vector<64x50xf32> -> vector<64x50xf32>
    %103 = arith.addf %98, %102 : vector<64x50xf32>
    %104 = arith.truncf %94 : vector<64x50xf32> to vector<64x50xbf16>
    %c2_50 = arith.constant 2 : index
    %c0_51 = arith.constant 0 : index
    %c0_52 = arith.constant 0 : index
    %105 = vector.load %arg7[%c2_50, %c0_51, %c0_52] : memref<3x50x50xbf16, #tpu.memory_space<vmem>>, vector<1x50x50xbf16>
    %106 = vector.shape_cast %105 : vector<1x50x50xbf16> to vector<50x50xbf16>
    %cst_53 = arith.constant dense<0.000000e+00> : vector<64x50xf32>
    %107 = tpu.matmul %104, %106, %cst_53 {dimension_numbers = #tpu.dot_dimension_numbers<[1], [0], [0], [1], [0, 0, 1, 1], [], []>} : vector<64x50xbf16>, vector<50x50xbf16>, vector<64x50xf32> -> vector<64x50xf32>
    %108 = arith.addf %103, %107 : vector<64x50xf32>
    %c0_54 = arith.constant 0 : index
    %c0_55 = arith.constant 0 : index
    %109 = vector.load %arg8[%c0_54, %c0_55] : memref<1x50xf32, #tpu.memory_space<vmem>>, vector<1x50xf32>
    %110 = vector.broadcast %109 : vector<1x50xf32> to vector<64x50xf32>
    %111 = arith.addf %108, %110 : vector<64x50xf32>
    %112 = math.tanh %111 : vector<64x50xf32>
    %113 = vector.shape_cast %112 : vector<64x50xf32> to vector<8x8x50xf32>
    %cst_56 = arith.constant dense<0xFF800000> : vector<8x50xf32>
    %114 = vector.multi_reduction <maximumf>, %113, %cst_56 [1] : vector<8x8x50xf32> to vector<8x50xf32>
    %115 = arith.truncf %114 : vector<8x50xf32> to vector<8x50xbf16>
    %c0_57 = arith.constant 0 : index
    %c0_58 = arith.constant 0 : index
    %116 = vector.load %arg9[%c0_57, %c0_58] : memref<50x20xbf16, #tpu.memory_space<vmem>>, vector<50x20xbf16>
    %cst_59 = arith.constant dense<0.000000e+00> : vector<8x20xf32>
    %117 = tpu.matmul %115, %116, %cst_59 {dimension_numbers = #tpu.dot_dimension_numbers<[1], [0], [0], [1], [0, 0, 1, 1], [], []>} : vector<8x50xbf16>, vector<50x20xbf16>, vector<8x20xf32> -> vector<8x20xf32>
    %c0_60 = arith.constant 0 : index
    %c0_61 = arith.constant 0 : index
    %118 = vector.load %arg10[%c0_60, %c0_61] : memref<1x20xf32, #tpu.memory_space<vmem>>, vector<1x20xf32>
    %119 = vector.broadcast %118 : vector<1x20xf32> to vector<8x20xf32>
    %120 = arith.addf %117, %119 : vector<8x20xf32>
    %121 = math.tanh %120 : vector<8x20xf32>
    %122 = arith.truncf %121 : vector<8x20xf32> to vector<8x20xbf16>
    %c0_62 = arith.constant 0 : index
    %c0_63 = arith.constant 0 : index
    %123 = vector.load %arg11[%c0_62, %c0_63] : memref<20x2xbf16, #tpu.memory_space<vmem>>, vector<20x2xbf16>
    %cst_64 = arith.constant dense<0.000000e+00> : vector<8x2xf32>
    %124 = tpu.matmul %122, %123, %cst_64 {dimension_numbers = #tpu.dot_dimension_numbers<[1], [0], [0], [1], [0, 0, 1, 1], [], []>} : vector<8x20xbf16>, vector<20x2xbf16>, vector<8x2xf32> -> vector<8x2xf32>
    %c0_65 = arith.constant 0 : index
    %c0_66 = arith.constant 0 : index
    %125 = vector.load %arg12[%c0_65, %c0_66] : memref<1x2xf32, #tpu.memory_space<vmem>>, vector<1x2xf32>
    %126 = vector.broadcast %125 : vector<1x2xf32> to vector<8x2xf32>
    %127 = arith.addf %124, %126 : vector<8x2xf32>
    %128 = math.tanh %127 : vector<8x2xf32>
    %cst_67 = arith.constant dense<0xFF800000> : vector<8xf32>
    %129 = vector.multi_reduction <maximumf>, %128, %cst_67 [1] : vector<8x2xf32> to vector<8xf32>
    %130 = vector.shape_cast %129 : vector<8xf32> to vector<8x1xf32>
    %131 = vector.broadcast %130 : vector<8x1xf32> to vector<8x2xf32>
    %132 = arith.subf %128, %131 : vector<8x2xf32>
    %133 = math.exp %132 : vector<8x2xf32>
    %cst_68 = arith.constant dense<0.000000e+00> : vector<8xf32>
    %134 = vector.multi_reduction <add>, %133, %cst_68 [1] : vector<8x2xf32> to vector<8xf32>
    %135 = vector.shape_cast %134 : vector<8xf32> to vector<8x1xf32>
    %136 = math.log %135 : vector<8x1xf32>
    %137 = arith.addf %130, %136 : vector<8x1xf32>
    %138 = vector.broadcast %137 : vector<8x1xf32> to vector<8x2xf32>
    %139 = arith.subf %128, %138 : vector<8x2xf32>
    %c0_69 = arith.constant 0 : index
    %c0_70 = arith.constant 0 : index
    %140 = vector.load %arg13[%c0_69, %c0_70] : memref<8x2xf32, #tpu.memory_space<vmem>>, vector<8x2xf32>
    tpu.vector_store %arg13[%c0_69, %c0_70], %139 {strides = array<i32>} : memref<8x2xf32, #tpu.memory_space<vmem>>, vector<8x2xf32>,
    return
  }
  func.func @transform_0(%arg0: i32) -> (i32, i32, i32) {
    %c0_i32 = arith.constant 0 : i32
    %c0_i32_0 = arith.constant 0 : i32
    %c0_i32_1 = arith.constant 0 : i32
    return %arg0, %c0_i32, %c0_i32_0 : i32, i32, i32
  }
  func.func @transform_1(%arg0: i32) -> (i32, i32, i32) {
    %c0_i32 = arith.constant 0 : i32
    %c0_i32_0 = arith.constant 0 : i32
    %c0_i32_1 = arith.constant 0 : i32
    return %arg0, %c0_i32, %c0_i32_0 : i32, i32, i32
  }
  func.func @transform_2(%arg0: i32) -> (i32, i32, i32) {
    %c0_i32 = arith.constant 0 : i32
    %c0_i32_0 = arith.constant 0 : i32
    %c0_i32_1 = arith.constant 0 : i32
    %c0_i32_2 = arith.constant 0 : i32
    return %c0_i32, %c0_i32_0, %c0_i32_1 : i32, i32, i32
  }
  func.func @transform_3(%arg0: i32) -> (i32, i32) {
    %c0_i32 = arith.constant 0 : i32
    %c0_i32_0 = arith.constant 0 : i32
    %c0_i32_1 = arith.constant 0 : i32
    return %c0_i32, %c0_i32_0 : i32, i32
  }
  func.func @transform_4(%arg0: i32) -> (i32, i32, i32) {
    %c0_i32 = arith.constant 0 : i32
    %c0_i32_0 = arith.constant 0 : i32
    %c0_i32_1 = arith.constant 0 : i32
    %c0_i32_2 = arith.constant 0 : i32
    return %c0_i32, %c0_i32_0, %c0_i32_1 : i32, i32, i32
  }
  func.func @transform_5(%arg0: i32) -> (i32, i32) {
    %c0_i32 = arith.constant 0 : i32
    %c0_i32_0 = arith.constant 0 : i32
    %c0_i32_1 = arith.constant 0 : i32
    return %c0_i32, %c0_i32_0 : i32, i32
  }
  func.func @transform_6(%arg0: i32) -> (i32, i32, i32) {
    %c0_i32 = arith.constant 0 : i32
    %c0_i32_0 = arith.constant 0 : i32
    %c0_i32_1 = arith.constant 0 : i32
    %c0_i32_2 = arith.constant 0 : i32
    return %c0_i32, %c0_i32_0, %c0_i32_1 : i32, i32, i32
  }
  func.func @transform_7(%arg0: i32) -> (i32, i32) {
    %c0_i32 = arith.constant 0 : i32
    %c0_i32_0 = arith.constant 0 : i32
    %c0_i32_1 = arith.constant 0 : i32
    return %c0_i32, %c0_i32_0 : i32, i32
  }
  func.func @transform_8(%arg0: i32) -> (i32, i32) {
    %c0_i32 = arith.constant 0 : i32
    %c0_i32_0 = arith.constant 0 : i32
    %c0_i32_1 = arith.constant 0 : i32
    return %c0_i32, %c0_i32_0 : i32, i32
  }
  func.func @transform_9(%arg0: i32) -> (i32, i32) {
    %c0_i32 = arith.constant 0 : i32
    %c0_i32_0 = arith.constant 0 : i32
    %c0_i32_1 = arith.constant 0 : i32
    return %c0_i32, %c0_i32_0 : i32, i32
  }
  func.func @transform_10(%arg0: i32) -> (i32, i32) {
    %c0_i32 = arith.constant 0 : i32
    %c0_i32_0 = arith.constant 0 : i32
    %c0_i32_1 = arith.constant 0 : i32
    return %c0_i32, %c0_i32_0 : i32, i32
  }
  func.func @transform_11(%arg0: i32) -> (i32, i32) {
    %c0_i32 = arith.constant 0 : i32
    %c0_i32_0 = arith.constant 0 : i32
    %c0_i32_1 = arith.constant 0 : i32
    return %c0_i32, %c0_i32_0 : i32, i32
  }
  func.func @transform_12(%arg0: i32) -> (i32, i32) {
    %c0_i32 = arith.constant 0 : i32
    %c0_i32_0 = arith.constant 0 : i32
    return %arg0, %c0_i32 : i32, i32
  }
}

</mosaic_0001>

<llo_original>
// kernel: tpu_custom_call.1
$region0: #{tpu_custom_call.1}
  #allocation0 [shape = 'u32[]', space=smem, size = 0x4, offset = 0x4, fixed_abs, tag = 'smem constant byte address 0x4 - core index']
  #allocation1 [shape = 'u32[144,128]{1,0:T(1,128)}', space=vmem, size = 0x12000, scoped, tag = 'internal scratch']
  %s0 = inlined_call_operand.vmem [shape: f32[16,8,4], index: 0, kind: input, shape index: {}]
  %s1 = inlined_call_operand.vmem [shape: s32[16,8,2], index: 1, kind: input, shape index: {}]
  %s2 = inlined_call_operand.vmem [shape: bf16[3,12,30], index: 2, kind: input, shape index: {}]
  %s3 = inlined_call_operand.vmem [shape: f32[1,30], index: 3, kind: input, shape index: {}]
  %s4 = inlined_call_operand.vmem [shape: bf16[3,30,50], index: 4, kind: input, shape index: {}]
  %s5 = inlined_call_operand.vmem [shape: f32[1,50], index: 5, kind: input, shape index: {}]
  %s6 = inlined_call_operand.vmem [shape: bf16[3,50,50], index: 6, kind: input, shape index: {}]
  %s7 = inlined_call_operand.vmem [shape: f32[1,50], index: 7, kind: input, shape index: {}]
  %s8 = inlined_call_operand.vmem [shape: bf16[50,20], index: 8, kind: input, shape index: {}]
  %s9 = inlined_call_operand.vmem [shape: f32[1,20], index: 9, kind: input, shape index: {}]
  %s10 = inlined_call_operand.vmem [shape: bf16[20,2], index: 10, kind: input, shape index: {}]
  %s11 = inlined_call_operand.vmem [shape: f32[1,2], index: 11, kind: input, shape index: {}]
  %s12 = inlined_call_operand.vmem [shape: f32[16,2], index: 12, kind: output, shape index: {}]
  %s13 = sld [smem:[#allocation0]]
  $region81: #{tpu_custom_call.1} parent=0
    _
  %s15 = ssub.s32 1, %s13
  %s16 = scalar_select 0, %s15, %s13
  loop: start=0, step=1, limit=4
  $region2: #{tpu_custom_call.1} parent=0 // loop_pre_header
    _
  $region3: #{tpu_custom_call.1} parent=0 // loop_header
    %s18 = sphi 0, %s22
    %p19 = scmp.ge.s32.totalorder %s18, 4
    %s28 = sphi 0, %s30
    %s31 = sphi 0, %s28
    %s32 = sphi 0, %s31
    %s48 = sphi 0, %s32
    %s54 = sphi 0, %s56
    %s57 = sphi 0, %s54
    %s58 = sphi 0, %s57
    %s74 = sphi 0, %s58
    %s78 = sphi 0, %s78
    %s80 = sphi 0, %s78
    %s81 = sphi 0, %s80
    %s95 = sphi 0, %s81
    %s99 = sphi 0, %s99
    %s101 = sphi 0, %s99
    %s102 = sphi 0, %s101
    %s116 = sphi 0, %s102
    %s120 = sphi 0, %s120
    %s122 = sphi 0, %s120
    %s123 = sphi 0, %s122
    %s137 = sphi 0, %s123
    %s141 = sphi 0, %s141
    %s143 = sphi 0, %s141
    %s144 = sphi 0, %s143
    %s158 = sphi 0, %s144
    %s162 = sphi 0, %s162
    %s164 = sphi 0, %s162
    %s165 = sphi 0, %s164
    %s179 = sphi 0, %s165
    %s183 = sphi 0, %s183
    %s185 = sphi 0, %s183
    %s186 = sphi 0, %s185
    %s200 = sphi 0, %s186
    %s204 = sphi 0, %s204
    %s206 = sphi 0, %s204
    %s207 = sphi 0, %s206
    %s221 = sphi 0, %s207
    %s225 = sphi 0, %s225
    %s227 = sphi 0, %s225
    %s228 = sphi 0, %s227
    %s242 = sphi 0, %s228
    %s246 = sphi 0, %s246
    %s248 = sphi 0, %s246
    %s249 = sphi 0, %s248
    %s263 = sphi 0, %s249
    %s267 = sphi 0, %s267
    %s269 = sphi 0, %s267
    %s270 = sphi 0, %s269
    %s284 = sphi 0, %s270
    %s290 = sphi 0, %s292
    %s293 = sphi 0, %s290
    %s294 = sphi 0, %s293
    %s310 = sphi 0, %s294
  $region4: #{tpu_custom_call.1} parent=0 // loop_header_branch
    %21 = sbr.rel (%p19) target = $region8
  $region5: #{tpu_custom_call.1} parent=0 // loop_body
    %s23 = ssub.s32 %s18, 1
    %s24 = ssub.s32 %s18, 2
    %s25 = sadd.s32 %s18, 1
    %s26 = ssub.s32 %s18, %s25
    %p27 = scmp.eq.s32.totalorder %s26, 0
    %s29 = sadd.s32 %s28, 1
    %s30 = scalar_select %p27, %s28, %s29
    %p33 = pneg %p27
    %p34 = scmp.eq.s32.totalorder %s18, 1
    %p35 = por %p33, %p34
    %p36 = scmp.ne.s32.totalorder %s28, %s31
    %p37 = scmp.eq.s32.totalorder %s18, 0
    %p38 = por %p36, %p37
    %p39 = scmp.ne.s32.totalorder %s28, %s31
    %p40 = scmp.eq.s32.totalorder %s23, 1
    %p41 = por %p39, %p40
    %p42 = scmp.ne.s32.totalorder %s31, %s32
    %p43 = scmp.eq.s32.totalorder %s23, 0
    %p44 = por %p42, %p43
    %p45 = scmp.ne.s32.totalorder %s31, %s32
    %p46 = scmp.eq.s32.totalorder %s24, 1
    %p47 = por %p45, %p46
    %p49 = scmp.ne.s32.totalorder %s32, %s48
    %p50 = scmp.eq.s32.totalorder %s24, 0
    %p51 = por %p49, %p50
    %s52 = ssub.s32 %s18, %s25
    %p53 = scmp.eq.s32.totalorder %s52, 0
    %s55 = sadd.s32 %s54, 1
    %s56 = scalar_select %p53, %s54, %s55
    %p59 = pneg %p53
    %p60 = scmp.eq.s32.totalorder %s18, 1
    %p61 = por %p59, %p60
    %p62 = scmp.ne.s32.totalorder %s54, %s57
    %p63 = scmp.eq.s32.totalorder %s18, 0
    %p64 = por %p62, %p63
    %p65 = scmp.ne.s32.totalorder %s54, %s57
    %p66 = scmp.eq.s32.totalorder %s23, 1
    %p67 = por %p65, %p66
    %p68 = scmp.ne.s32.totalorder %s57, %s58
    %p69 = scmp.eq.s32.totalorder %s23, 0
    %p70 = por %p68, %p69
    %p71 = scmp.ne.s32.totalorder %s57, %s58
    %p72 = scmp.eq.s32.totalorder %s24, 1
    %p73 = por %p71, %p72
    %p75 = scmp.ne.s32.totalorder %s58, %s74
    %p76 = scmp.eq.s32.totalorder %s24, 0
    %p77 = por %p75, %p76
    %s79 = sadd.s32 %s78, 1
    %p82 = scmp.eq.s32.totalorder %s18, 1
    %p83 = scmp.ne.s32.totalorder %s78, %s80
    %p84 = scmp.eq.s32.totalorder %s18, 0
    %p85 = por %p83, %p84
    %p86 = scmp.ne.s32.totalorder %s78, %s80
    %p87 = scmp.eq.s32.totalorder %s23, 1
    %p88 = por %p86, %p87
    %p89 = scmp.ne.s32.totalorder %s80, %s81
    %p90 = scmp.eq.s32.totalorder %s23, 0
    %p91 = por %p89, %p90
    %p92 = scmp.ne.s32.totalorder %s80, %s81
    %p93 = scmp.eq.s32.totalorder %s24, 1
    %p94 = por %p92, %p93
    %p96 = scmp.ne.s32.totalorder %s81, %s95
    %p97 = scmp.eq.s32.totalorder %s24, 0
    %p98 = por %p96, %p97
    %s100 = sadd.s32 %s99, 1
    %p103 = scmp.eq.s32.totalorder %s18, 1
    %p104 = scmp.ne.s32.totalorder %s99, %s101
    %p105 = scmp.eq.s32.totalorder %s18, 0
    %p106 = por %p104, %p105
    %p107 = scmp.ne.s32.totalorder %s99, %s101
    %p108 = scmp.eq.s32.totalorder %s23, 1
    %p109 = por %p107, %p108
    %p110 = scmp.ne.s32.totalorder %s101, %s102
    %p111 = scmp.eq.s32.totalorder %s23, 0
    %p112 = por %p110, %p111
    %p113 = scmp.ne.s32.totalorder %s101, %s102
    %p114 = scmp.eq.s32.totalorder %s24, 1
    %p115 = por %p113, %p114
    %p117 = scmp.ne.s32.totalorder %s102, %s116
    %p118 = scmp.eq.s32.totalorder %s24, 0
    %p119 = por %p117, %p118
    %s121 = sadd.s32 %s120, 1
    %p124 = scmp.eq.s32.totalorder %s18, 1
    %p125 = scmp.ne.s32.totalorder %s120, %s122
    %p126 = scmp.eq.s32.totalorder %s18, 0
    %p127 = por %p125, %p126
    %p128 = scmp.ne.s32.totalorder %s120, %s122
    %p129 = scmp.eq.s32.totalorder %s23, 1
    %p130 = por %p128, %p129
    %p131 = scmp.ne.s32.totalorder %s122, %s123
    %p132 = scmp.eq.s32.totalorder %s23, 0
    %p133 = por %p131, %p132
    %p134 = scmp.ne.s32.totalorder %s122, %s123
    %p135 = scmp.eq.s32.totalorder %s24, 1
    %p136 = por %p134, %p135
    %p138 = scmp.ne.s32.totalorder %s123, %s137
    %p139 = scmp.eq.s32.totalorder %s24, 0
    %p140 = por %p138, %p139
    %s142 = sadd.s32 %s141, 1
    %p145 = scmp.eq.s32.totalorder %s18, 1
    %p146 = scmp.ne.s32.totalorder %s141, %s143
    %p147 = scmp.eq.s32.totalorder %s18, 0
    %p148 = por %p146, %p147
    %p149 = scmp.ne.s32.totalorder %s141, %s143
    %p150 = scmp.eq.s32.totalorder %s23, 1
    %p151 = por %p149, %p150
    %p152 = scmp.ne.s32.totalorder %s143, %s144
    %p153 = scmp.eq.s32.totalorder %s23, 0
    %p154 = por %p152, %p153
    %p155 = scmp.ne.s32.totalorder %s143, %s144
    %p156 = scmp.eq.s32.totalorder %s24, 1
    %p157 = por %p155, %p156
    %p159 = scmp.ne.s32.totalorder %s144, %s158
    %p160 = scmp.eq.s32.totalorder %s24, 0
    %p161 = por %p159, %p160
    %s163 = sadd.s32 %s162, 1
    %p166 = scmp.eq.s32.totalorder %s18, 1
    %p167 = scmp.ne.s32.totalorder %s162, %s164
    %p168 = scmp.eq.s32.totalorder %s18, 0
    %p169 = por %p167, %p168
    %p170 = scmp.ne.s32.totalorder %s162, %s164
    %p171 = scmp.eq.s32.totalorder %s23, 1
    %p172 = por %p170, %p171
    %p173 = scmp.ne.s32.totalorder %s164, %s165
    %p174 = scmp.eq.s32.totalorder %s23, 0
    %p175 = por %p173, %p174
    %p176 = scmp.ne.s32.totalorder %s164, %s165
    %p177 = scmp.eq.s32.totalorder %s24, 1
    %p178 = por %p176, %p177
    %p180 = scmp.ne.s32.totalorder %s165, %s179
    %p181 = scmp.eq.s32.totalorder %s24, 0
    %p182 = por %p180, %p181
    %s184 = sadd.s32 %s183, 1
    %p187 = scmp.eq.s32.totalorder %s18, 1
    %p188 = scmp.ne.s32.totalorder %s183, %s185
    %p189 = scmp.eq.s32.totalorder %s18, 0
    %p190 = por %p188, %p189
    %p191 = scmp.ne.s32.totalorder %s183, %s185
    %p192 = scmp.eq.s32.totalorder %s23, 1
    %p193 = por %p191, %p192
    %p194 = scmp.ne.s32.totalorder %s185, %s186
    %p195 = scmp.eq.s32.totalorder %s23, 0
    %p196 = por %p194, %p195
    %p197 = scmp.ne.s32.totalorder %s185, %s186
    %p198 = scmp.eq.s32.totalorder %s24, 1
    %p199 = por %p197, %p198
    %p201 = scmp.ne.s32.totalorder %s186, %s200
    %p202 = scmp.eq.s32.totalorder %s24, 0
    %p203 = por %p201, %p202
    %s205 = sadd.s32 %s204, 1
    %p208 = scmp.eq.s32.totalorder %s18, 1
    %p209 = scmp.ne.s32.totalorder %s204, %s206
    %p210 = scmp.eq.s32.totalorder %s18, 0
    %p211 = por %p209, %p210
    %p212 = scmp.ne.s32.totalorder %s204, %s206
    %p213 = scmp.eq.s32.totalorder %s23, 1
    %p214 = por %p212, %p213
    %p215 = scmp.ne.s32.totalorder %s206, %s207
    %p216 = scmp.eq.s32.totalorder %s23, 0
    %p217 = por %p215, %p216
    %p218 = scmp.ne.s32.totalorder %s206, %s207
    %p219 = scmp.eq.s32.totalorder %s24, 1
    %p220 = por %p218, %p219
    %p222 = scmp.ne.s32.totalorder %s207, %s221
    %p223 = scmp.eq.s32.totalorder %s24, 0
    %p224 = por %p222, %p223
    %s226 = sadd.s32 %s225, 1
    %p229 = scmp.eq.s32.totalorder %s18, 1
    %p230 = scmp.ne.s32.totalorder %s225, %s227
    %p231 = scmp.eq.s32.totalorder %s18, 0
    %p232 = por %p230, %p231
    %p233 = scmp.ne.s32.totalorder %s225, %s227
    %p234 = scmp.eq.s32.totalorder %s23, 1
    %p235 = por %p233, %p234
    %p236 = scmp.ne.s32.totalorder %s227, %s228
    %p237 = scmp.eq.s32.totalorder %s23, 0
    %p238 = por %p236, %p237
    %p239 = scmp.ne.s32.totalorder %s227, %s228
    %p240 = scmp.eq.s32.totalorder %s24, 1
    %p241 = por %p239, %p240
    %p243 = scmp.ne.s32.totalorder %s228, %s242
    %p244 = scmp.eq.s32.totalorder %s24, 0
    %p245 = por %p243, %p244
    %s247 = sadd.s32 %s246, 1
    %p250 = scmp.eq.s32.totalorder %s18, 1
    %p251 = scmp.ne.s32.totalorder %s246, %s248
    %p252 = scmp.eq.s32.totalorder %s18, 0
    %p253 = por %p251, %p252
    %p254 = scmp.ne.s32.totalorder %s246, %s248
    %p255 = scmp.eq.s32.totalorder %s23, 1
    %p256 = por %p254, %p255
    %p257 = scmp.ne.s32.totalorder %s248, %s249
    %p258 = scmp.eq.s32.totalorder %s23, 0
    %p259 = por %p257, %p258
    %p260 = scmp.ne.s32.totalorder %s248, %s249
    %p261 = scmp.eq.s32.totalorder %s24, 1
    %p262 = por %p260, %p261
    %p264 = scmp.ne.s32.totalorder %s249, %s263
    %p265 = scmp.eq.s32.totalorder %s24, 0
    %p266 = por %p264, %p265
    %s268 = sadd.s32 %s267, 1
    %p271 = scmp.eq.s32.totalorder %s18, 1
    %p272 = scmp.ne.s32.totalorder %s267, %s269
    %p273 = scmp.eq.s32.totalorder %s18, 0
    %p274 = por %p272, %p273
    %p275 = scmp.ne.s32.totalorder %s267, %s269
    %p276 = scmp.eq.s32.totalorder %s23, 1
    %p277 = por %p275, %p276
    %p278 = scmp.ne.s32.totalorder %s269, %s270
    %p279 = scmp.eq.s32.totalorder %s23, 0
    %p280 = por %p278, %p279
    %p281 = scmp.ne.s32.totalorder %s269, %s270
    %p282 = scmp.eq.s32.totalorder %s24, 1
    %p283 = por %p281, %p282
    %p285 = scmp.ne.s32.totalorder %s270, %s284
    %p286 = scmp.eq.s32.totalorder %s24, 0
    %p287 = por %p285, %p286
    %s288 = ssub.s32 %s18, %s25
    %p289 = scmp.eq.s32.totalorder %s288, 0
    %s291 = sadd.s32 %s290, 1
    %s292 = scalar_select %p289, %s290, %s291
    %p295 = pneg %p289
    %p296 = scmp.eq.s32.totalorder %s18, 1
    %p297 = por %p295, %p296
    %p298 = scmp.ne.s32.totalorder %s290, %s293
    %p299 = scmp.eq.s32.totalorder %s18, 0
    %p300 = por %p298, %p299
    %p301 = scmp.ne.s32.totalorder %s290, %s293
    %p302 = scmp.eq.s32.totalorder %s23, 1
    %p303 = por %p301, %p302
    %p304 = scmp.ne.s32.totalorder %s293, %s294
    %p305 = scmp.eq.s32.totalorder %s23, 0
    %p306 = por %p304, %p305
    %p307 = scmp.ne.s32.totalorder %s293, %s294
    %p308 = scmp.eq.s32.totalorder %s24, 1
    %p309 = por %p307, %p308
    %p311 = scmp.ne.s32.totalorder %s294, %s310
    %p312 = scmp.eq.s32.totalorder %s24, 0
    %p313 = por %p311, %p312
    %p314 = scmp.le.s32.totalorder 1, %s18
    %p315 = scmp.lt.s32.totalorder %s18, 3
    %p316 = pnand %p314, %p315
    %p317 = pneg %p316
    // Predicated region
    $region9: #{tpu_custom_call.1} parent=5 // pred_check
      _
    $region10: #{tpu_custom_call.1} parent=5 // pred_check_branch
      %319 = sbr.rel (%p316) target = $region12
    $region11: #{tpu_custom_call.1} parent=5 // pred_region
      %s320 = ssub.s32 %s18, 1
      // Predicated region
      $region13: #{tpu_custom_call.1} parent=11 // pred_check
        %p321 = pneg %p91
      $region14: #{tpu_custom_call.1} parent=11 // pred_check_branch
        %323 = sbr.rel (%p321) target = $region16
      $region15: #{tpu_custom_call.1} parent=11 // pred_region
        _
      $region16: #{tpu_custom_call.1} parent=11 // pred_fallthru
        _
      // Predicated region
      $region17: #{tpu_custom_call.1} parent=11 // pred_check
        %p324 = pneg %p112
      $region18: #{tpu_custom_call.1} parent=11 // pred_check_branch
        %326 = sbr.rel (%p324) target = $region20
      $region19: #{tpu_custom_call.1} parent=11 // pred_region
        _
      $region20: #{tpu_custom_call.1} parent=11 // pred_fallthru
        _
      // Predicated region
      $region21: #{tpu_custom_call.1} parent=11 // pred_check
        %p327 = pneg %p133
      $region22: #{tpu_custom_call.1} parent=11 // pred_check_branch
        %329 = sbr.rel (%p327) target = $region24
      $region23: #{tpu_custom_call.1} parent=11 // pred_region
        _
      $region24: #{tpu_custom_call.1} parent=11 // pred_fallthru
        _
      // Predicated region
      $region25: #{tpu_custom_call.1} parent=11 // pred_check
        %p330 = pneg %p154
      $region26: #{tpu_custom_call.1} parent=11 // pred_check_branch
        %332 = sbr.rel (%p330) target = $region28
      $region27: #{tpu_custom_call.1} parent=11 // pred_region
        _
      $region28: #{tpu_custom_call.1} parent=11 // pred_fallthru
        _
      // Predicated region
      $region29: #{tpu_custom_call.1} parent=11 // pred_check
        %p333 = pneg %p175
      $region30: #{tpu_custom_call.1} parent=11 // pred_check_branch
        %335 = sbr.rel (%p333) target = $region32
      $region31: #{tpu_custom_call.1} parent=11 // pred_region
        _
      $region32: #{tpu_custom_call.1} parent=11 // pred_fallthru
        _
      // Predicated region
      $region33: #{tpu_custom_call.1} parent=11 // pred_check
        %p336 = pneg %p196
      $region34: #{tpu_custom_call.1} parent=11 // pred_check_branch
        %338 = sbr.rel (%p336) target = $region36
      $region35: #{tpu_custom_call.1} parent=11 // pred_region
        _
      $region36: #{tpu_custom_call.1} parent=11 // pred_fallthru
        _
      // Predicated region
      $region37: #{tpu_custom_call.1} parent=11 // pred_check
        %p339 = pneg %p217
      $region38: #{tpu_custom_call.1} parent=11 // pred_check_branch
        %341 = sbr.rel (%p339) target = $region40
      $region39: #{tpu_custom_call.1} parent=11 // pred_region
        _
      $region40: #{tpu_custom_call.1} parent=11 // pred_fallthru
        _
      // Predicated region
      $region41: #{tpu_custom_call.1} parent=11 // pred_check
        %p342 = pneg %p238
      $region42: #{tpu_custom_call.1} parent=11 // pred_check_branch
        %344 = sbr.rel (%p342) target = $region44
      $region43: #{tpu_custom_call.1} parent=11 // pred_region
        _
      $region44: #{tpu_custom_call.1} parent=11 // pred_fallthru
        _
      // Predicated region
      $region45: #{tpu_custom_call.1} parent=11 // pred_check
        %p345 = pneg %p259
      $region46: #{tpu_custom_call.1} parent=11 // pred_check_branch
        %347 = sbr.rel (%p345) target = $region48
      $region47: #{tpu_custom_call.1} parent=11 // pred_region
        _
      $region48: #{tpu_custom_call.1} parent=11 // pred_fallthru
        _
      // Predicated region
      $region49: #{tpu_custom_call.1} parent=11 // pred_check
        %p348 = pneg %p280
      $region50: #{tpu_custom_call.1} parent=11 // pred_check_branch
        %350 = sbr.rel (%p348) target = $region52
      $region51: #{tpu_custom_call.1} parent=11 // pred_region
        _
      $region52: #{tpu_custom_call.1} parent=11 // pred_fallthru
        _
    $region12: #{tpu_custom_call.1} parent=5 // pred_fallthru
      _
    %p351 = scmp.lt.s32.totalorder %s18, 2
    // Predicated region
    $region53: #{tpu_custom_call.1} parent=5 // pred_check
      %p352 = pneg %p351
    $region54: #{tpu_custom_call.1} parent=5 // pred_check_branch
      %354 = sbr.rel (%p352) target = $region56
    $region55: #{tpu_custom_call.1} parent=5 // pred_region
      // Predicated region
      $region57: #{tpu_custom_call.1} parent=55 // pred_check
        %p355 = pneg %p38
      $region58: #{tpu_custom_call.1} parent=55 // pred_check_branch
        %357 = sbr.rel (%p355) target = $region60
      $region59: #{tpu_custom_call.1} parent=55 // pred_region
        %s358 = smul.u32 8, %s18
        %p359 = scmp.lt.s32.totalorder %s358, 15
        %s360 = scalar_select %p359, %s358, 15
        %s361 = smul.addr %s360, 8
        %s362 = scalar_lea.vmem %s0, %s361
        %s363 = smul.u32 8, %s18
      $region60: #{tpu_custom_call.1} parent=55 // pred_fallthru
        _
      // Predicated region
      $region61: #{tpu_custom_call.1} parent=55 // pred_check
        %p364 = pneg %p64
      $region62: #{tpu_custom_call.1} parent=55 // pred_check_branch
        %366 = sbr.rel (%p364) target = $region64
      $region63: #{tpu_custom_call.1} parent=55 // pred_region
        %s367 = smul.u32 8, %s18
        %p368 = scmp.lt.s32.totalorder %s367, 15
        %s369 = scalar_select %p368, %s367, 15
        %s370 = smul.addr %s369, 8
        %s371 = scalar_lea.vmem %s1, %s370
        %s372 = smul.u32 8, %s18
      $region64: #{tpu_custom_call.1} parent=55 // pred_fallthru
        _
    $region56: #{tpu_custom_call.1} parent=5 // pred_fallthru
      _
    %p373 = scmp.le.s32.totalorder 1, %s18
    %p374 = scmp.lt.s32.totalorder %s18, 3
    %p375 = pnand %p373, %p374
    %p376 = pneg %p375
    // Predicated region
    $region65: #{tpu_custom_call.1} parent=5 // pred_check
      _
    $region66: #{tpu_custom_call.1} parent=5 // pred_check_branch
      %378 = sbr.rel (%p375) target = $region68
    $region67: #{tpu_custom_call.1} parent=5 // pred_region
      %s379 = ssub.s32 %s18, 1
      %s380 = smul.u32 8, %s23
      %p381 = scmp.lt.s32.totalorder %s380, 15
      %s382 = scalar_select %p381, %s380, 15
      %s383 = smul.addr %s382, 8
      %s384 = scalar_lea.vmem %s0, %s383
      %p385 = pneg %p44
      %p386 = pneg %p41
      %s387 = smul.u32 8, %s23
      %p388 = scmp.lt.s32.totalorder %s387, 15
      %s389 = scalar_select %p388, %s387, 15
      %s390 = smul.addr %s389, 8
      %s391 = scalar_lea.vmem %s1, %s390
      %p392 = pneg %p70
      %p393 = pneg %p67
      %p394 = pneg %p91
      %p395 = pneg %p88
      %p396 = pneg %p112
      %p397 = pneg %p109
      %p398 = pneg %p133
      %p399 = pneg %p130
      %p400 = pneg %p154
      %p401 = pneg %p151
      %p402 = pneg %p175
      %p403 = pneg %p172
      %p404 = pneg %p196
      %p405 = pneg %p193
      %p406 = pneg %p217
      %p407 = pneg %p214
      %p408 = pneg %p238
      %p409 = pneg %p235
      %p410 = pneg %p259
      %p411 = pneg %p256
      %p412 = pneg %p280
      %p413 = pneg %p277
      %p414 = pneg %p306
      %p415 = pneg %p303
      %p416 = scmp.lt.s32.totalorder %s23, 1
      %s417 = scalar_select %p416, %s23, 1
      %s418 = smul.addr %s417, 8
      %s419 = scalar_lea.vmem %s12, %s418
      %s420 = smul.u32 8, %s23
      %p421 = scmp.lt.s32.totalorder %s420, 15
      %s422 = scalar_select %p421, %s420, 15
      %s423 = smul.addr %s422, 8
      %s424 = scalar_lea.vmem %s0, %s423
      %s425 = smul.u32 8, %s23
      %s426 = smul.u32 8, %s23
      %p427 = scmp.lt.s32.totalorder %s426, 15
      %s428 = scalar_select %p427, %s426, 15
      %s429 = smul.addr %s428, 8
      %s430 = scalar_lea.vmem %s1, %s429
      %s431 = smul.u32 8, %s23
      %p432 = scmp.lt.s32.totalorder %s23, 1
      %s433 = scalar_select %p432, %s23, 1
      %s434 = smul.addr %s433, 8
      %s435 = scalar_lea.vmem %s12, %s434
      %v437 = vld [vmem:[%s424] sm:$0xff]
      %v438 = vld [vmem:[%s424 + $0x8] sm:$0xff]
      %v439 = vld [vmem:[%s424 + $0x10] sm:$0xff]
      %v440 = vld [vmem:[%s424 + $0x18] sm:$0xff]
      %v441 = vld [vmem:[%s424 + $0x20] sm:$0xff]
      %v442 = vld [vmem:[%s424 + $0x28] sm:$0xff]
      %v443 = vld [vmem:[%s424 + $0x30] sm:$0xff]
      %v444 = vld [vmem:[%s424 + $0x38] sm:$0xff]
      %v445 = vld [vmem:[%s430] sm:$0xff]
      %v446 = vld [vmem:[%s430 + $0x8] sm:$0xff]
      %v447 = vld [vmem:[%s430 + $0x10] sm:$0xff]
      %v448 = vld [vmem:[%s430 + $0x18] sm:$0xff]
      %v449 = vld [vmem:[%s430 + $0x20] sm:$0xff]
      %v450 = vld [vmem:[%s430 + $0x28] sm:$0xff]
      %v451 = vld [vmem:[%s430 + $0x30] sm:$0xff]
      %v452 = vld [vmem:[%s430 + $0x38] sm:$0xff]
      %v453 = vlaneseq
      %v454 = vand.u32 %v453, 127
      %455 = vset.pattern.permute.xlu0 0
      %456 = vperm.xlu0 %455, %v445
      %v457 = vpop.permute.xlu0 %456
      %458 = vset.pattern.permute.xlu0 0
      %459 = vperm.xlu0 %458, %v446
      %v460 = vpop.permute.xlu0 %459
      %461 = vset.pattern.permute.xlu0 0
      %462 = vperm.xlu0 %461, %v447
      %v463 = vpop.permute.xlu0 %462
      %464 = vset.pattern.permute.xlu0 0
      %465 = vperm.xlu0 %464, %v448
      %v466 = vpop.permute.xlu0 %465
      %467 = vset.pattern.permute.xlu0 0
      %468 = vperm.xlu0 %467, %v449
      %v469 = vpop.permute.xlu0 %468
      %470 = vset.pattern.permute.xlu0 0
      %471 = vperm.xlu0 %470, %v450
      %v472 = vpop.permute.xlu0 %471
      %473 = vset.pattern.permute.xlu0 0
      %474 = vperm.xlu0 %473, %v451
      %v475 = vpop.permute.xlu0 %474
      %476 = vset.pattern.permute.xlu0 0
      %477 = vperm.xlu0 %476, %v452
      %v478 = vpop.permute.xlu0 %477
      %vm479 = vcmp.eq.s32.totalorder %v454, %v457
      %vm480 = vcmp.eq.s32.totalorder %v454, %v460
      %vm481 = vcmp.eq.s32.totalorder %v454, %v463
      %vm482 = vcmp.eq.s32.totalorder %v454, %v466
      %vm483 = vcmp.eq.s32.totalorder %v454, %v469
      %vm484 = vcmp.eq.s32.totalorder %v454, %v472
      %vm485 = vcmp.eq.s32.totalorder %v454, %v475
      %vm486 = vcmp.eq.s32.totalorder %v454, %v478
      %v487 = vsel %vm479, 1, 0
      %v488 = vsel %vm480, 1, 0
      %v489 = vsel %vm481, 1, 0
      %v490 = vsel %vm482, 1, 0
      %v491 = vsel %vm483, 1, 0
      %v492 = vsel %vm484, 1, 0
      %v493 = vsel %vm485, 1, 0
      %v494 = vsel %vm486, 1, 0
      %v495 = vcvt.s32.f32 %v487
      %v496 = vcvt.s32.f32 %v488
      %v497 = vcvt.s32.f32 %v489
      %v498 = vcvt.s32.f32 %v490
      %v499 = vcvt.s32.f32 %v491
      %v500 = vcvt.s32.f32 %v492
      %v501 = vcvt.s32.f32 %v493
      %v502 = vcvt.s32.f32 %v494
      %v503 = vadd.f32 %v495, 0.0
      %v504 = vadd.f32 %v496, 0.0
      %v505 = vadd.f32 %v497, 0.0
      %v506 = vadd.f32 %v498, 0.0
      %v507 = vadd.f32 %v499, 0.0
      %v508 = vadd.f32 %v500, 0.0
      %v509 = vadd.f32 %v501, 0.0
      %v510 = vadd.f32 %v502, 0.0
      %v511 = vadd.s32 %v445, 5
      %v512 = vadd.s32 %v446, 5
      %v513 = vadd.s32 %v447, 5
      %v514 = vadd.s32 %v448, 5
      %v515 = vadd.s32 %v449, 5
      %v516 = vadd.s32 %v450, 5
      %v517 = vadd.s32 %v451, 5
      %v518 = vadd.s32 %v452, 5
      %519 = vset.pattern.permute.xlu0 1
      %520 = vperm.xlu0 %519, %v511
      %v521 = vpop.permute.xlu0 %520
      %522 = vset.pattern.permute.xlu0 1
      %523 = vperm.xlu0 %522, %v512
      %v524 = vpop.permute.xlu0 %523
      %525 = vset.pattern.permute.xlu0 1
      %526 = vperm.xlu0 %525, %v513
      %v527 = vpop.permute.xlu0 %526
      %528 = vset.pattern.permute.xlu0 1
      %529 = vperm.xlu0 %528, %v514
      %v530 = vpop.permute.xlu0 %529
      %531 = vset.pattern.permute.xlu0 1
      %532 = vperm.xlu0 %531, %v515
      %v533 = vpop.permute.xlu0 %532
      %534 = vset.pattern.permute.xlu0 1
      %535 = vperm.xlu0 %534, %v516
      %v536 = vpop.permute.xlu0 %535
      %537 = vset.pattern.permute.xlu0 1
      %538 = vperm.xlu0 %537, %v517
      %v539 = vpop.permute.xlu0 %538
      %540 = vset.pattern.permute.xlu0 1
      %541 = vperm.xlu0 %540, %v518
      %v542 = vpop.permute.xlu0 %541
      %vm543 = vcmp.eq.s32.totalorder %v454, %v521
      %vm544 = vcmp.eq.s32.totalorder %v454, %v524
      %vm545 = vcmp.eq.s32.totalorder %v454, %v527
      %vm546 = vcmp.eq.s32.totalorder %v454, %v530
      %vm547 = vcmp.eq.s32.totalorder %v454, %v533
      %vm548 = vcmp.eq.s32.totalorder %v454, %v536
      %vm549 = vcmp.eq.s32.totalorder %v454, %v539
      %vm550 = vcmp.eq.s32.totalorder %v454, %v542
      %v551 = vsel %vm543, 1, 0
      %v552 = vsel %vm544, 1, 0
      %v553 = vsel %vm545, 1, 0
      %v554 = vsel %vm546, 1, 0
      %v555 = vsel %vm547, 1, 0
      %v556 = vsel %vm548, 1, 0
      %v557 = vsel %vm549, 1, 0
      %v558 = vsel %vm550, 1, 0
      %v559 = vcvt.s32.f32 %v551
      %v560 = vcvt.s32.f32 %v552
      %v561 = vcvt.s32.f32 %v553
      %v562 = vcvt.s32.f32 %v554
      %v563 = vcvt.s32.f32 %v555
      %v564 = vcvt.s32.f32 %v556
      %v565 = vcvt.s32.f32 %v557
      %v566 = vcvt.s32.f32 %v558
      %v567 = vadd.f32 %v503, %v559
      %v568 = vadd.f32 %v504, %v560
      %v569 = vadd.f32 %v505, %v561
      %v570 = vadd.f32 %v506, %v562
      %v571 = vadd.f32 %v507, %v563
      %v572 = vadd.f32 %v508, %v564
      %v573 = vadd.f32 %v509, %v565
      %v574 = vadd.f32 %v510, %v566
      %583 = vrot.lane.b32.xlu0 %v567, 4
      %v584 = vpop.permute.xlu0 %583
      %585 = vrot.lane.b32.xlu0 %v568, 4
      %v586 = vpop.permute.xlu0 %585
      %587 = vrot.lane.b32.xlu0 %v569, 4
      %v588 = vpop.permute.xlu0 %587
      %589 = vrot.lane.b32.xlu0 %v570, 4
      %v590 = vpop.permute.xlu0 %589
      %591 = vrot.lane.b32.xlu0 %v571, 4
      %v592 = vpop.permute.xlu0 %591
      %593 = vrot.lane.b32.xlu0 %v572, 4
      %v594 = vpop.permute.xlu0 %593
      %595 = vrot.lane.b32.xlu0 %v573, 4
      %v596 = vpop.permute.xlu0 %595
      %597 = vrot.lane.b32.xlu0 %v574, 4
      %v598 = vpop.permute.xlu0 %597
      %vm607 = vcmask 31744
      %v608 = vsel %vm607, %v437, %v584
      %v609 = vsel %vm607, %v438, %v586
      %v610 = vsel %vm607, %v439, %v588
      %v611 = vsel %vm607, %v440, %v590
      %v612 = vsel %vm607, %v441, %v592
      %v613 = vsel %vm607, %v442, %v594
      %v614 = vsel %vm607, %v443, %v596
      %v615 = vsel %vm607, %v444, %v598
      %v616 = vlaneseq
      %v617 = vshrl.u32 %v616, 7
      %vm618 = vcmp.eq.s32.totalorder %v617, 0
      %vm619 = vcmp.eq.s32.totalorder %v617, 7
      %v620 = vrot.slane %v608, 7
      %v621 = vrot.slane %v609, 7
      %v622 = vrot.slane %v610, 7
      %v623 = vrot.slane %v611, 7
      %v624 = vrot.slane %v612, 7
      %v625 = vrot.slane %v613, 7
      %v626 = vrot.slane %v614, 7
      %v627 = vrot.slane %v615, 7
      %vm628 = vcmp.lt.s32.totalorder %v617, 1
      %v629 = vsel %vm628, %v626, %v627
      %v630 = vsel %vm628, %v625, %v626
      %v631 = vsel %vm628, %v624, %v625
      %v632 = vsel %vm628, %v623, %v624
      %v633 = vsel %vm628, %v622, %v623
      %v634 = vsel %vm628, %v621, %v622
      %v635 = vsel %vm628, %v620, %v621
      %v636 = vsel %vm628, %v627, %v620
      %v637 = vsel %vm618, 1, 0
      %vm638 = vcmp.eq.s32.totalorder %v637, 1
      %v639 = vsel %vm638, 0.0, %v636
      %v640 = vsel %vm638, 0.0, %v635
      %v641 = vsel %vm638, 0.0, %v634
      %v642 = vsel %vm638, 0.0, %v633
      %v643 = vsel %vm638, 0.0, %v632
      %v644 = vsel %vm638, 0.0, %v631
      %v645 = vsel %vm638, 0.0, %v630
      %v646 = vsel %vm638, 0.0, %v629
      %v647 = vrot.slane %v608, 1
      %v648 = vrot.slane %v609, 1
      %v649 = vrot.slane %v610, 1
      %v650 = vrot.slane %v611, 1
      %v651 = vrot.slane %v612, 1
      %v652 = vrot.slane %v613, 1
      %v653 = vrot.slane %v614, 1
      %v654 = vrot.slane %v615, 1
      %vm655 = vcmp.lt.s32.totalorder %v617, 7
      %v656 = vsel %vm655, %v653, %v654
      %v657 = vsel %vm655, %v652, %v653
      %v658 = vsel %vm655, %v651, %v652
      %v659 = vsel %vm655, %v650, %v651
      %v660 = vsel %vm655, %v649, %v650
      %v661 = vsel %vm655, %v648, %v649
      %v662 = vsel %vm655, %v647, %v648
      %v663 = vsel %vm655, %v654, %v647
      %v664 = vsel %vm619, 1, 0
      %vm665 = vcmp.eq.s32.totalorder %v664, 1
      %v666 = vsel %vm665, 0.0, %v662
      %v667 = vsel %vm665, 0.0, %v661
      %v668 = vsel %vm665, 0.0, %v660
      %v669 = vsel %vm665, 0.0, %v659
      %v670 = vsel %vm665, 0.0, %v658
      %v671 = vsel %vm665, 0.0, %v657
      %v672 = vsel %vm665, 0.0, %v656
      %v673 = vsel %vm665, 0.0, %v663
      %v674 = vpack.c.bf16 %v640, %v639
      %v675 = vpack.c.bf16 %v642, %v641
      %v676 = vpack.c.bf16 %v644, %v643
      %v677 = vpack.c.bf16 %v646, %v645
      %v678 = vld [vmem:[%s2] sm:$0xf]
      %v679 = vld [vmem:[%s2 + $0x4] sm:$0x3]
      %v680 = vpack.c.bf16 %v609, %v608
      %v681 = vpack.c.bf16 %v611, %v610
      %v682 = vpack.c.bf16 %v613, %v612
      %v683 = vpack.c.bf16 %v615, %v614
      %s684 = scalar_lea.vmem %s2, 8
      %v685 = vld [vmem:[%s684] sm:$0xf]
      %v686 = vld [vmem:[%s684 + $0x4] sm:$0x3]
      %v689 = vunpack.c.l.b16 %v685
      %v690 = vunpack.c.l.b16 %v686
      %v691 = vpack.c.b16 %v690, %v689
      %vm692 = vcmask 97280
      %v694 = vsel %vm692, %v680, 0
      %v697 = vsel %vm692, %v681, 0
      %v700 = vsel %vm692, %v682, 0
      %v703 = vsel %vm692, %v683, 0
      %vm705 = vcmask 1045504
      %v707 = vsel %vm705, %v691, 0
      %709 = vmatprep.subr.bf16.mxu0 0
      %710 = vmatpush1.bf16.msra.mxu0 %v707
      %711 = vmatprep.subr.bf16.mxu0 0
      %712 = vmatpush1.bf16.msra.mxu0 0
      %713 = vmatprep.subr.bf16.mxu0 0
      %714 = vmatpush1.bf16.msra.mxu0 0
      %715 = vmatprep.subr.bf16.mxu0 0
      %716 = vmatpush1.bf16.msra.mxu0 0
      %717 = vmatprep.subr.bf16.mxu0 0
      %718 = vmatpush1.bf16.msra.mxu0 0
      %719 = vmatprep.subr.bf16.mxu0 0
      %720 = vmatpush1.bf16.msra.mxu0 0
      %721 = vmatprep.subr.bf16.mxu0 0
      %722 = vmatpush1.bf16.msra.mxu0 0
      %723 = vmatprep.subr.bf16.mxu0 0
      %724 = vmatpush1.bf16.msra.mxu0 0
      %725 = vmatprep.subr.bf16.mxu0 0
      %726 = vmatpush1.bf16.msra.mxu0 0
      %727 = vmatprep.subr.bf16.mxu0 0
      %728 = vmatpush1.bf16.msra.mxu0 0
      %729 = vmatprep.subr.bf16.mxu0 0
      %730 = vmatpush1.bf16.msra.mxu0 0
      %731 = vmatprep.subr.bf16.mxu0 0
      %732 = vmatpush1.bf16.msra.mxu0 0
      %733 = vmatprep.subr.bf16.mxu0 0
      %734 = vmatpush1.bf16.msra.mxu0 0
      %735 = vmatprep.subr.bf16.mxu0 0
      %736 = vmatpush1.bf16.msra.mxu0 0
      %737 = vmatprep.subr.bf16.mxu0 0
      %738 = vmatpush1.bf16.msra.mxu0 0
      %739 = vmatprep.subr.bf16.mxu0 0
      %740 = vmatpush1.bf16.msra.mxu0 0
      %741 = vmatprep.mubr.bf16.mxu0 0
      %742 = vmatmul.mubr.bf16.gmra.mrb[0].mxu0 %v694
      %v743 = vpop.f32.mrb[0].mxu0
      %v744 = vadd.f32 0.0, %v743
      %v745 = vpop.f32.mrb[0].mxu0
      %v746 = vpop.f32.mrb[0].mxu0
      %v747 = vadd.f32 0.0, %v746
      %v748 = vpop.f32.mrb[0].mxu0
      %749 = vmatprep.mubr.bf16.mxu0 0
      %750 = vmatmul.mubr.bf16.gmra.mrb[0].mxu0 %v697
      %v751 = vpop.f32.mrb[0].mxu0
      %v752 = vadd.f32 0.0, %v751
      %v753 = vpop.f32.mrb[0].mxu0
      %v754 = vpop.f32.mrb[0].mxu0
      %v755 = vadd.f32 0.0, %v754
      %v756 = vpop.f32.mrb[0].mxu0
      %757 = vmatprep.mubr.bf16.mxu0 0
      %758 = vmatmul.mubr.bf16.gmra.mrb[0].mxu0 %v700
      %v759 = vpop.f32.mrb[0].mxu0
      %v760 = vadd.f32 0.0, %v759
      %v761 = vpop.f32.mrb[0].mxu0
      %v762 = vpop.f32.mrb[0].mxu0
      %v763 = vadd.f32 0.0, %v762
      %v764 = vpop.f32.mrb[0].mxu0
      %765 = vmatprep.mubr.bf16.mxu0 0
      %766 = vmatmul.mubr.bf16.gmra.mrb[0].mxu0 %v703
      %v767 = vpop.f32.mrb[0].mxu0
      %v768 = vadd.f32 0.0, %v767
      %v769 = vpop.f32.mrb[0].mxu0
      %v770 = vpop.f32.mrb[0].mxu0
      %v771 = vadd.f32 0.0, %v770
      %v772 = vpop.f32.mrb[0].mxu0
      %773 = vdwg.mxu0
      %v776 = vunpack.c.l.b16 %v678
      %v777 = vunpack.c.l.b16 %v679
      %v778 = vpack.c.b16 %v777, %v776
      %v780 = vsel %vm692, %v674, 0
      %v783 = vsel %vm692, %v675, 0
      %v786 = vsel %vm692, %v676, 0
      %v789 = vsel %vm692, %v677, 0
      %v792 = vsel %vm705, %v778, 0
      %794 = vmatprep.subr.bf16.mxu0 0
      %795 = vmatpush1.bf16.msra.mxu0 %v792
      %796 = vmatprep.subr.bf16.mxu0 0
      %797 = vmatpush1.bf16.msra.mxu0 0
      %798 = vmatprep.subr.bf16.mxu0 0
      %799 = vmatpush1.bf16.msra.mxu0 0
      %800 = vmatprep.subr.bf16.mxu0 0
      %801 = vmatpush1.bf16.msra.mxu0 0
      %802 = vmatprep.subr.bf16.mxu0 0
      %803 = vmatpush1.bf16.msra.mxu0 0
      %804 = vmatprep.subr.bf16.mxu0 0
      %805 = vmatpush1.bf16.msra.mxu0 0
      %806 = vmatprep.subr.bf16.mxu0 0
      %807 = vmatpush1.bf16.msra.mxu0 0
      %808 = vmatprep.subr.bf16.mxu0 0
      %809 = vmatpush1.bf16.msra.mxu0 0
      %810 = vmatprep.subr.bf16.mxu0 0
      %811 = vmatpush1.bf16.msra.mxu0 0
      %812 = vmatprep.subr.bf16.mxu0 0
      %813 = vmatpush1.bf16.msra.mxu0 0
      %814 = vmatprep.subr.bf16.mxu0 0
      %815 = vmatpush1.bf16.msra.mxu0 0
      %816 = vmatprep.subr.bf16.mxu0 0
      %817 = vmatpush1.bf16.msra.mxu0 0
      %818 = vmatprep.subr.bf16.mxu0 0
      %819 = vmatpush1.bf16.msra.mxu0 0
      %820 = vmatprep.subr.bf16.mxu0 0
      %821 = vmatpush1.bf16.msra.mxu0 0
      %822 = vmatprep.subr.bf16.mxu0 0
      %823 = vmatpush1.bf16.msra.mxu0 0
      %824 = vmatprep.subr.bf16.mxu0 0
      %825 = vmatpush1.bf16.msra.mxu0 0
      %826 = vmatprep.mubr.bf16.mxu0 0
      %827 = vmatmul.mubr.bf16.gmra.mrb[0].mxu0 %v780
      %v828 = vpop.f32.mrb[0].mxu0
      %v829 = vadd.f32 %v744, %v828
      %v830 = vpop.f32.mrb[0].mxu0
      %v831 = vpop.f32.mrb[0].mxu0
      %v832 = vadd.f32 %v747, %v831
      %v833 = vpop.f32.mrb[0].mxu0
      %834 = vmatprep.mubr.bf16.mxu0 0
      %835 = vmatmul.mubr.bf16.gmra.mrb[0].mxu0 %v783
      %v836 = vpop.f32.mrb[0].mxu0
      %v837 = vadd.f32 %v752, %v836
      %v838 = vpop.f32.mrb[0].mxu0
      %v839 = vpop.f32.mrb[0].mxu0
      %v840 = vadd.f32 %v755, %v839
      %v841 = vpop.f32.mrb[0].mxu0
      %842 = vmatprep.mubr.bf16.mxu0 0
      %843 = vmatmul.mubr.bf16.gmra.mrb[0].mxu0 %v786
      %v844 = vpop.f32.mrb[0].mxu0
      %v845 = vadd.f32 %v760, %v844
      %v846 = vpop.f32.mrb[0].mxu0
      %v847 = vpop.f32.mrb[0].mxu0
      %v848 = vadd.f32 %v763, %v847
      %v849 = vpop.f32.mrb[0].mxu0
      %850 = vmatprep.mubr.bf16.mxu0 0
      %851 = vmatmul.mubr.bf16.gmra.mrb[0].mxu0 %v789
      %v852 = vpop.f32.mrb[0].mxu0
      %v853 = vadd.f32 %v768, %v852
      %v854 = vpop.f32.mrb[0].mxu0
      %v855 = vpop.f32.mrb[0].mxu0
      %v856 = vadd.f32 %v771, %v855
      %v857 = vpop.f32.mrb[0].mxu0
      %858 = vdwg.mxu0
      %v859 = vpack.c.bf16 %v667, %v666
      %v860 = vpack.c.bf16 %v669, %v668
      %v861 = vpack.c.bf16 %v671, %v670
      %v862 = vpack.c.bf16 %v673, %v672
      %s863 = scalar_lea.vmem %s2, 16
      %v864 = vld [vmem:[%s863] sm:$0xf]
      %v865 = vld [vmem:[%s863 + $0x4] sm:$0x3]
      %v868 = vunpack.c.l.b16 %v864
      %v869 = vunpack.c.l.b16 %v865
      %v870 = vpack.c.b16 %v869, %v868
      %v872 = vsel %vm692, %v859, 0
      %v875 = vsel %vm692, %v860, 0
      %v878 = vsel %vm692, %v861, 0
      %v881 = vsel %vm692, %v862, 0
      %v884 = vsel %vm705, %v870, 0
      %886 = vmatprep.subr.bf16.mxu0 0
      %887 = vmatpush1.bf16.msra.mxu0 %v884
      %888 = vmatprep.subr.bf16.mxu0 0
      %889 = vmatpush1.bf16.msra.mxu0 0
      %890 = vmatprep.subr.bf16.mxu0 0
      %891 = vmatpush1.bf16.msra.mxu0 0
      %892 = vmatprep.subr.bf16.mxu0 0
      %893 = vmatpush1.bf16.msra.mxu0 0
      %894 = vmatprep.subr.bf16.mxu0 0
      %895 = vmatpush1.bf16.msra.mxu0 0
      %896 = vmatprep.subr.bf16.mxu0 0
      %897 = vmatpush1.bf16.msra.mxu0 0
      %898 = vmatprep.subr.bf16.mxu0 0
      %899 = vmatpush1.bf16.msra.mxu0 0
      %900 = vmatprep.subr.bf16.mxu0 0
      %901 = vmatpush1.bf16.msra.mxu0 0
      %902 = vmatprep.subr.bf16.mxu0 0
      %903 = vmatpush1.bf16.msra.mxu0 0
      %904 = vmatprep.subr.bf16.mxu0 0
      %905 = vmatpush1.bf16.msra.mxu0 0
      %906 = vmatprep.subr.bf16.mxu0 0
      %907 = vmatpush1.bf16.msra.mxu0 0
      %908 = vmatprep.subr.bf16.mxu0 0
      %909 = vmatpush1.bf16.msra.mxu0 0
      %910 = vmatprep.subr.bf16.mxu0 0
      %911 = vmatpush1.bf16.msra.mxu0 0
      %912 = vmatprep.subr.bf16.mxu0 0
      %913 = vmatpush1.bf16.msra.mxu0 0
      %914 = vmatprep.subr.bf16.mxu0 0
      %915 = vmatpush1.bf16.msra.mxu0 0
      %916 = vmatprep.subr.bf16.mxu0 0
      %917 = vmatpush1.bf16.msra.mxu0 0
      %918 = vmatprep.mubr.bf16.mxu0 0
      %919 = vmatmul.mubr.bf16.gmra.mrb[0].mxu0 %v872
      %v920 = vpop.f32.mrb[0].mxu0
      %v921 = vadd.f32 0.0, %v920
      %v922 = vpop.f32.mrb[0].mxu0
      %v923 = vpop.f32.mrb[0].mxu0
      %v924 = vadd.f32 0.0, %v923
      %v925 = vpop.f32.mrb[0].mxu0
      %926 = vmatprep.mubr.bf16.mxu0 0
      %927 = vmatmul.mubr.bf16.gmra.mrb[0].mxu0 %v875
      %v928 = vpop.f32.mrb[0].mxu0
      %v929 = vadd.f32 0.0, %v928
      %v930 = vpop.f32.mrb[0].mxu0
      %v931 = vpop.f32.mrb[0].mxu0
      %v932 = vadd.f32 0.0, %v931
      %v933 = vpop.f32.mrb[0].mxu0
      %934 = vmatprep.mubr.bf16.mxu0 0
      %935 = vmatmul.mubr.bf16.gmra.mrb[0].mxu0 %v878
      %v936 = vpop.f32.mrb[0].mxu0
      %v937 = vadd.f32 0.0, %v936
      %v938 = vpop.f32.mrb[0].mxu0
      %v939 = vpop.f32.mrb[0].mxu0
      %v940 = vadd.f32 0.0, %v939
      %v941 = vpop.f32.mrb[0].mxu0
      %942 = vmatprep.mubr.bf16.mxu0 0
      %943 = vmatmul.mubr.bf16.gmra.mrb[0].mxu0 %v881
      %v944 = vpop.f32.mrb[0].mxu0
      %v945 = vadd.f32 0.0, %v944
      %v946 = vpop.f32.mrb[0].mxu0
      %v947 = vpop.f32.mrb[0].mxu0
      %v948 = vadd.f32 0.0, %v947
      %v949 = vpop.f32.mrb[0].mxu0
      %950 = vdwg.mxu0
      %v951 = vadd.f32 %v829, %v921
      %v952 = vadd.f32 %v832, %v924
      %v953 = vadd.f32 %v837, %v929
      %v954 = vadd.f32 %v840, %v932
      %v955 = vadd.f32 %v845, %v937
      %v956 = vadd.f32 %v848, %v940
      %v957 = vadd.f32 %v853, %v945
      %v958 = vadd.f32 %v856, %v948
      %v959 = vld [vmem:[%s3] sm:$0x1]
      %v961 = vlaneseq
      %v962 = vshrl.u32 %v961, 7
      %v963 = vsub.s32 0, %v962
      %v964 = vrot.slane %v959, %v963
      %v966 = vadd.f32 %v951, %v964
      %v967 = vadd.f32 %v952, %v964
      %v968 = vadd.f32 %v953, %v964
      %v969 = vadd.f32 %v954, %v964
      %v970 = vadd.f32 %v955, %v964
      %v971 = vadd.f32 %v956, %v964
      %v972 = vadd.f32 %v957, %v964
      %v973 = vadd.f32 %v958, %v964
      %v974 = vtanh.pop %v966
      %v975 = vtanh.pop %v967
      %v976 = vtanh.pop %v968
      %v977 = vtanh.pop %v969
      %v978 = vtanh.pop %v970
      %v979 = vtanh.pop %v971
      %v980 = vtanh.pop %v972
      %v981 = vtanh.pop %v973
      %v982 = vrot.slane %v974, 7
      %v983 = vrot.slane %v975, 7
      %v984 = vrot.slane %v976, 7
      %v985 = vrot.slane %v977, 7
      %v986 = vrot.slane %v978, 7
      %v987 = vrot.slane %v979, 7
      %v988 = vrot.slane %v980, 7
      %v989 = vrot.slane %v981, 7
      %v990 = vsel %vm628, %v988, %v989
      %v991 = vsel %vm628, %v987, %v988
      %v992 = vsel %vm628, %v986, %v987
      %v993 = vsel %vm628, %v985, %v986
      %v994 = vsel %vm628, %v984, %v985
      %v995 = vsel %vm628, %v983, %v984
      %v996 = vsel %vm628, %v982, %v983
      %v997 = vsel %vm628, %v989, %v982
      %v998 = vsel %vm638, 0.0, %v997
      %v999 = vsel %vm638, 0.0, %v996
      %v1000 = vsel %vm638, 0.0, %v995
      %v1001 = vsel %vm638, 0.0, %v994
      %v1002 = vsel %vm638, 0.0, %v993
      %v1003 = vsel %vm638, 0.0, %v992
      %v1004 = vsel %vm638, 0.0, %v991
      %v1005 = vsel %vm638, 0.0, %v990
      %v1006 = vrot.slane %v974, 1
      %v1007 = vrot.slane %v975, 1
      %v1008 = vrot.slane %v976, 1
      %v1009 = vrot.slane %v977, 1
      %v1010 = vrot.slane %v978, 1
      %v1011 = vrot.slane %v979, 1
      %v1012 = vrot.slane %v980, 1
      %v1013 = vrot.slane %v981, 1
      %v1014 = vsel %vm655, %v1012, %v1013
      %v1015 = vsel %vm655, %v1011, %v1012
      %v1016 = vsel %vm655, %v1010, %v1011
      %v1017 = vsel %vm655, %v1009, %v1010
      %v1018 = vsel %vm655, %v1008, %v1009
      %v1019 = vsel %vm655, %v1007, %v1008
      %v1020 = vsel %vm655, %v1006, %v1007
      %v1021 = vsel %vm655, %v1013, %v1006
      %v1022 = vsel %vm665, 0.0, %v1020
      %v1023 = vsel %vm665, 0.0, %v1019
      %v1024 = vsel %vm665, 0.0, %v1018
      %v1025 = vsel %vm665, 0.0, %v1017
      %v1026 = vsel %vm665, 0.0, %v1016
      %v1027 = vsel %vm665, 0.0, %v1015
      %v1028 = vsel %vm665, 0.0, %v1014
      %v1029 = vsel %vm665, 0.0, %v1021
      %v1030 = vpack.c.bf16 %v999, %v998
      %v1031 = vpack.c.bf16 %v1001, %v1000
      %v1032 = vpack.c.bf16 %v1003, %v1002
      %v1033 = vpack.c.bf16 %v1005, %v1004
      %v1034 = vld [vmem:[%s4] sm:$0xf]
      %v1035 = vld [vmem:[%s4 + $0x4] sm:$0xf]
      %v1036 = vld [vmem:[%s4 + $0x8] sm:$0xf]
      %v1037 = vld [vmem:[%s4 + $0xc] sm:$0x7]
      %v1038 = vpack.c.bf16 %v975, %v974
      %v1039 = vpack.c.bf16 %v977, %v976
      %v1040 = vpack.c.bf16 %v979, %v978
      %v1041 = vpack.c.bf16 %v981, %v980
      %s1042 = scalar_lea.vmem %s4, 16
      %v1043 = vld [vmem:[%s1042] sm:$0xf]
      %v1044 = vld [vmem:[%s1042 + $0x4] sm:$0xf]
      %v1045 = vld [vmem:[%s1042 + $0x8] sm:$0xf]
      %v1046 = vld [vmem:[%s1042 + $0xc] sm:$0x7]
      %v1051 = vunpack.c.l.b16 %v1043
      %v1052 = vunpack.c.l.b16 %v1044
      %v1053 = vunpack.c.l.b16 %v1045
      %v1054 = vunpack.c.l.b16 %v1046
      %v1055 = vpack.c.b16 %v1052, %v1051
      %v1056 = vpack.c.b16 %v1054, %v1053
      %vm1058 = vcmask 244736
      %v1060 = vsel %vm1058, %v1038, 0
      %v1063 = vsel %vm1058, %v1039, 0
      %v1066 = vsel %vm1058, %v1040, 0
      %v1069 = vsel %vm1058, %v1041, 0
      %vm1071 = vcmask 1046528
      %v1073 = vsel %vm1071, %v1056, 0
      %1075 = vmatprep.subr.bf16.mxu0 0
      %1076 = vmatpush1.bf16.msra.mxu0 %v1055
      %1077 = vmatprep.subr.bf16.mxu0 0
      %1078 = vmatpush1.bf16.msra.mxu0 %v1073
      %1079 = vmatprep.subr.bf16.mxu0 0
      %1080 = vmatpush1.bf16.msra.mxu0 0
      %1081 = vmatprep.subr.bf16.mxu0 0
      %1082 = vmatpush1.bf16.msra.mxu0 0
      %1083 = vmatprep.subr.bf16.mxu0 0
      %1084 = vmatpush1.bf16.msra.mxu0 0
      %1085 = vmatprep.subr.bf16.mxu0 0
      %1086 = vmatpush1.bf16.msra.mxu0 0
      %1087 = vmatprep.subr.bf16.mxu0 0
      %1088 = vmatpush1.bf16.msra.mxu0 0
      %1089 = vmatprep.subr.bf16.mxu0 0
      %1090 = vmatpush1.bf16.msra.mxu0 0
      %1091 = vmatprep.subr.bf16.mxu0 0
      %1092 = vmatpush1.bf16.msra.mxu0 0
      %1093 = vmatprep.subr.bf16.mxu0 0
      %1094 = vmatpush1.bf16.msra.mxu0 0
      %1095 = vmatprep.subr.bf16.mxu0 0
      %1096 = vmatpush1.bf16.msra.mxu0 0
      %1097 = vmatprep.subr.bf16.mxu0 0
      %1098 = vmatpush1.bf16.msra.mxu0 0
      %1099 = vmatprep.subr.bf16.mxu0 0
      %1100 = vmatpush1.bf16.msra.mxu0 0
      %1101 = vmatprep.subr.bf16.mxu0 0
      %1102 = vmatpush1.bf16.msra.mxu0 0
      %1103 = vmatprep.subr.bf16.mxu0 0
      %1104 = vmatpush1.bf16.msra.mxu0 0
      %1105 = vmatprep.subr.bf16.mxu0 0
      %1106 = vmatpush1.bf16.msra.mxu0 0
      %1107 = vmatprep.mubr.bf16.mxu0 0
      %1108 = vmatmul.mubr.bf16.gmra.mrb[0].mxu0 %v1060
      %v1109 = vpop.f32.mrb[0].mxu0
      %v1110 = vadd.f32 0.0, %v1109
      %v1111 = vpop.f32.mrb[0].mxu0
      %v1112 = vpop.f32.mrb[0].mxu0
      %v1113 = vadd.f32 0.0, %v1112
      %v1114 = vpop.f32.mrb[0].mxu0
      %1115 = vmatprep.mubr.bf16.mxu0 0
      %1116 = vmatmul.mubr.bf16.gmra.mrb[0].mxu0 %v1063
      %v1117 = vpop.f32.mrb[0].mxu0
      %v1118 = vadd.f32 0.0, %v1117
      %v1119 = vpop.f32.mrb[0].mxu0
      %v1120 = vpop.f32.mrb[0].mxu0
      %v1121 = vadd.f32 0.0, %v1120
      %v1122 = vpop.f32.mrb[0].mxu0
      %1123 = vmatprep.mubr.bf16.mxu0 0
      %1124 = vmatmul.mubr.bf16.gmra.mrb[0].mxu0 %v1066
      %v1125 = vpop.f32.mrb[0].mxu0
      %v1126 = vadd.f32 0.0, %v1125
      %v1127 = vpop.f32.mrb[0].mxu0
      %v1128 = vpop.f32.mrb[0].mxu0
      %v1129 = vadd.f32 0.0, %v1128
      %v1130 = vpop.f32.mrb[0].mxu0
      %1131 = vmatprep.mubr.bf16.mxu0 0
      %1132 = vmatmul.mubr.bf16.gmra.mrb[0].mxu0 %v1069
      %v1133 = vpop.f32.mrb[0].mxu0
      %v1134 = vadd.f32 0.0, %v1133
      %v1135 = vpop.f32.mrb[0].mxu0
      %v1136 = vpop.f32.mrb[0].mxu0
      %v1137 = vadd.f32 0.0, %v1136
      %v1138 = vpop.f32.mrb[0].mxu0
      %1139 = vdwg.mxu0
      %v1144 = vunpack.c.l.b16 %v1034
      %v1145 = vunpack.c.l.b16 %v1035
      %v1146 = vunpack.c.l.b16 %v1036
      %v1147 = vunpack.c.l.b16 %v1037
      %v1148 = vpack.c.b16 %v1145, %v1144
      %v1149 = vpack.c.b16 %v1147, %v1146
      %v1152 = vsel %vm1058, %v1030, 0
      %v1155 = vsel %vm1058, %v1031, 0
      %v1158 = vsel %vm1058, %v1032, 0
      %v1161 = vsel %vm1058, %v1033, 0
      %v1164 = vsel %vm1071, %v1149, 0
      %1166 = vmatprep.subr.bf16.mxu0 0
      %1167 = vmatpush1.bf16.msra.mxu0 %v1148
      %1168 = vmatprep.subr.bf16.mxu0 0
      %1169 = vmatpush1.bf16.msra.mxu0 %v1164
      %1170 = vmatprep.subr.bf16.mxu0 0
      %1171 = vmatpush1.bf16.msra.mxu0 0
      %1172 = vmatprep.subr.bf16.mxu0 0
      %1173 = vmatpush1.bf16.msra.mxu0 0
      %1174 = vmatprep.subr.bf16.mxu0 0
      %1175 = vmatpush1.bf16.msra.mxu0 0
      %1176 = vmatprep.subr.bf16.mxu0 0
      %1177 = vmatpush1.bf16.msra.mxu0 0
      %1178 = vmatprep.subr.bf16.mxu0 0
      %1179 = vmatpush1.bf16.msra.mxu0 0
      %1180 = vmatprep.subr.bf16.mxu0 0
      %1181 = vmatpush1.bf16.msra.mxu0 0
      %1182 = vmatprep.subr.bf16.mxu0 0
      %1183 = vmatpush1.bf16.msra.mxu0 0
      %1184 = vmatprep.subr.bf16.mxu0 0
      %1185 = vmatpush1.bf16.msra.mxu0 0
      %1186 = vmatprep.subr.bf16.mxu0 0
      %1187 = vmatpush1.bf16.msra.mxu0 0
      %1188 = vmatprep.subr.bf16.mxu0 0
      %1189 = vmatpush1.bf16.msra.mxu0 0
      %1190 = vmatprep.subr.bf16.mxu0 0
      %1191 = vmatpush1.bf16.msra.mxu0 0
      %1192 = vmatprep.subr.bf16.mxu0 0
      %1193 = vmatpush1.bf16.msra.mxu0 0
      %1194 = vmatprep.subr.bf16.mxu0 0
      %1195 = vmatpush1.bf16.msra.mxu0 0
      %1196 = vmatprep.subr.bf16.mxu0 0
      %1197 = vmatpush1.bf16.msra.mxu0 0
      %1198 = vmatprep.mubr.bf16.mxu0 0
      %1199 = vmatmul.mubr.bf16.gmra.mrb[0].mxu0 %v1152
      %v1200 = vpop.f32.mrb[0].mxu0
      %v1201 = vadd.f32 %v1110, %v1200
      %v1202 = vpop.f32.mrb[0].mxu0
      %v1203 = vpop.f32.mrb[0].mxu0
      %v1204 = vadd.f32 %v1113, %v1203
      %v1205 = vpop.f32.mrb[0].mxu0
      %1206 = vmatprep.mubr.bf16.mxu0 0
      %1207 = vmatmul.mubr.bf16.gmra.mrb[0].mxu0 %v1155
      %v1208 = vpop.f32.mrb[0].mxu0
      %v1209 = vadd.f32 %v1118, %v1208
      %v1210 = vpop.f32.mrb[0].mxu0
      %v1211 = vpop.f32.mrb[0].mxu0
      %v1212 = vadd.f32 %v1121, %v1211
      %v1213 = vpop.f32.mrb[0].mxu0
      %1214 = vmatprep.mubr.bf16.mxu0 0
      %1215 = vmatmul.mubr.bf16.gmra.mrb[0].mxu0 %v1158
      %v1216 = vpop.f32.mrb[0].mxu0
      %v1217 = vadd.f32 %v1126, %v1216
      %v1218 = vpop.f32.mrb[0].mxu0
      %v1219 = vpop.f32.mrb[0].mxu0
      %v1220 = vadd.f32 %v1129, %v1219
      %v1221 = vpop.f32.mrb[0].mxu0
      %1222 = vmatprep.mubr.bf16.mxu0 0
      %1223 = vmatmul.mubr.bf16.gmra.mrb[0].mxu0 %v1161
      %v1224 = vpop.f32.mrb[0].mxu0
      %v1225 = vadd.f32 %v1134, %v1224
      %v1226 = vpop.f32.mrb[0].mxu0
      %v1227 = vpop.f32.mrb[0].mxu0
      %v1228 = vadd.f32 %v1137, %v1227
      %v1229 = vpop.f32.mrb[0].mxu0
      %1230 = vdwg.mxu0
      %v1231 = vpack.c.bf16 %v1023, %v1022
      %v1232 = vpack.c.bf16 %v1025, %v1024
      %v1233 = vpack.c.bf16 %v1027, %v1026
      %v1234 = vpack.c.bf16 %v1029, %v1028
      %s1235 = scalar_lea.vmem %s4, 32
      %v1236 = vld [vmem:[%s1235] sm:$0xf]
      %v1237 = vld [vmem:[%s1235 + $0x4] sm:$0xf]
      %v1238 = vld [vmem:[%s1235 + $0x8] sm:$0xf]
      %v1239 = vld [vmem:[%s1235 + $0xc] sm:$0x7]
      %v1244 = vunpack.c.l.b16 %v1236
      %v1245 = vunpack.c.l.b16 %v1237
      %v1246 = vunpack.c.l.b16 %v1238
      %v1247 = vunpack.c.l.b16 %v1239
      %v1248 = vpack.c.b16 %v1245, %v1244
      %v1249 = vpack.c.b16 %v1247, %v1246
      %v1252 = vsel %vm1058, %v1231, 0
      %v1255 = vsel %vm1058, %v1232, 0
      %v1258 = vsel %vm1058, %v1233, 0
      %v1261 = vsel %vm1058, %v1234, 0
      %v1264 = vsel %vm1071, %v1249, 0
      %1266 = vmatprep.subr.bf16.mxu0 0
      %1267 = vmatpush1.bf16.msra.mxu0 %v1248
      %1268 = vmatprep.subr.bf16.mxu0 0
      %1269 = vmatpush1.bf16.msra.mxu0 %v1264
      %1270 = vmatprep.subr.bf16.mxu0 0
      %1271 = vmatpush1.bf16.msra.mxu0 0
      %1272 = vmatprep.subr.bf16.mxu0 0
      %1273 = vmatpush1.bf16.msra.mxu0 0
      %1274 = vmatprep.subr.bf16.mxu0 0
      %1275 = vmatpush1.bf16.msra.mxu0 0
      %1276 = vmatprep.subr.bf16.mxu0 0
      %1277 = vmatpush1.bf16.msra.mxu0 0
      %1278 = vmatprep.subr.bf16.mxu0 0
      %1279 = vmatpush1.bf16.msra.mxu0 0
      %1280 = vmatprep.subr.bf16.mxu0 0
      %1281 = vmatpush1.bf16.msra.mxu0 0
      %1282 = vmatprep.subr.bf16.mxu0 0
      %1283 = vmatpush1.bf16.msra.mxu0 0
      %1284 = vmatprep.subr.bf16.mxu0 0
      %1285 = vmatpush1.bf16.msra.mxu0 0
      %1286 = vmatprep.subr.bf16.mxu0 0
      %1287 = vmatpush1.bf16.msra.mxu0 0
      %1288 = vmatprep.subr.bf16.mxu0 0
      %1289 = vmatpush1.bf16.msra.mxu0 0
      %1290 = vmatprep.subr.bf16.mxu0 0
      %1291 = vmatpush1.bf16.msra.mxu0 0
      %1292 = vmatprep.subr.bf16.mxu0 0
      %1293 = vmatpush1.bf16.msra.mxu0 0
      %1294 = vmatprep.subr.bf16.mxu0 0
      %1295 = vmatpush1.bf16.msra.mxu0 0
      %1296 = vmatprep.subr.bf16.mxu0 0
      %1297 = vmatpush1.bf16.msra.mxu0 0
      %1298 = vmatprep.mubr.bf16.mxu0 0
      %1299 = vmatmul.mubr.bf16.gmra.mrb[0].mxu0 %v1252
      %v1300 = vpop.f32.mrb[0].mxu0
      %v1301 = vadd.f32 0.0, %v1300
      %v1302 = vpop.f32.mrb[0].mxu0
      %v1303 = vpop.f32.mrb[0].mxu0
      %v1304 = vadd.f32 0.0, %v1303
      %v1305 = vpop.f32.mrb[0].mxu0
      %1306 = vmatprep.mubr.bf16.mxu0 0
      %1307 = vmatmul.mubr.bf16.gmra.mrb[0].mxu0 %v1255
      %v1308 = vpop.f32.mrb[0].mxu0
      %v1309 = vadd.f32 0.0, %v1308
      %v1310 = vpop.f32.mrb[0].mxu0
      %v1311 = vpop.f32.mrb[0].mxu0
      %v1312 = vadd.f32 0.0, %v1311
      %v1313 = vpop.f32.mrb[0].mxu0
      %1314 = vmatprep.mubr.bf16.mxu0 0
      %1315 = vmatmul.mubr.bf16.gmra.mrb[0].mxu0 %v1258
      %v1316 = vpop.f32.mrb[0].mxu0
      %v1317 = vadd.f32 0.0, %v1316
      %v1318 = vpop.f32.mrb[0].mxu0
      %v1319 = vpop.f32.mrb[0].mxu0
      %v1320 = vadd.f32 0.0, %v1319
      %v1321 = vpop.f32.mrb[0].mxu0
      %1322 = vmatprep.mubr.bf16.mxu0 0
      %1323 = vmatmul.mubr.bf16.gmra.mrb[0].mxu0 %v1261
      %v1324 = vpop.f32.mrb[0].mxu0
      %v1325 = vadd.f32 0.0, %v1324
      %v1326 = vpop.f32.mrb[0].mxu0
      %v1327 = vpop.f32.mrb[0].mxu0
      %v1328 = vadd.f32 0.0, %v1327
      %v1329 = vpop.f32.mrb[0].mxu0
      %1330 = vdwg.mxu0
      %v1331 = vadd.f32 %v1201, %v1301
      %v1332 = vadd.f32 %v1204, %v1304
      %v1333 = vadd.f32 %v1209, %v1309
      %v1334 = vadd.f32 %v1212, %v1312
      %v1335 = vadd.f32 %v1217, %v1317
      %v1336 = vadd.f32 %v1220, %v1320
      %v1337 = vadd.f32 %v1225, %v1325
      %v1338 = vadd.f32 %v1228, %v1328
      %v1339 = vld [vmem:[%s5] sm:$0x1]
      %v1341 = vlaneseq
      %v1342 = vshrl.u32 %v1341, 7
      %v1343 = vsub.s32 0, %v1342
      %v1344 = vrot.slane %v1339, %v1343
      %v1346 = vadd.f32 %v1331, %v1344
      %v1347 = vadd.f32 %v1332, %v1344
      %v1348 = vadd.f32 %v1333, %v1344
      %v1349 = vadd.f32 %v1334, %v1344
      %v1350 = vadd.f32 %v1335, %v1344
      %v1351 = vadd.f32 %v1336, %v1344
      %v1352 = vadd.f32 %v1337, %v1344
      %v1353 = vadd.f32 %v1338, %v1344
      %v1354 = vtanh.pop %v1346
      %v1355 = vtanh.pop %v1347
      %v1356 = vtanh.pop %v1348
      %v1357 = vtanh.pop %v1349
      %v1358 = vtanh.pop %v1350
      %v1359 = vtanh.pop %v1351
      %v1360 = vtanh.pop %v1352
      %v1361 = vtanh.pop %v1353
      %v1362 = vrot.slane %v1354, 7
      %v1363 = vrot.slane %v1355, 7
      %v1364 = vrot.slane %v1356, 7
      %v1365 = vrot.slane %v1357, 7
      %v1366 = vrot.slane %v1358, 7
      %v1367 = vrot.slane %v1359, 7
      %v1368 = vrot.slane %v1360, 7
      %v1369 = vrot.slane %v1361, 7
      %v1370 = vsel %vm628, %v1368, %v1369
      %v1371 = vsel %vm628, %v1367, %v1368
      %v1372 = vsel %vm628, %v1366, %v1367
      %v1373 = vsel %vm628, %v1365, %v1366
      %v1374 = vsel %vm628, %v1364, %v1365
      %v1375 = vsel %vm628, %v1363, %v1364
      %v1376 = vsel %vm628, %v1362, %v1363
      %v1377 = vsel %vm628, %v1369, %v1362
      %v1378 = vsel %vm638, 0.0, %v1377
      %v1379 = vsel %vm638, 0.0, %v1376
      %v1380 = vsel %vm638, 0.0, %v1375
      %v1381 = vsel %vm638, 0.0, %v1374
      %v1382 = vsel %vm638, 0.0, %v1373
      %v1383 = vsel %vm638, 0.0, %v1372
      %v1384 = vsel %vm638, 0.0, %v1371
      %v1385 = vsel %vm638, 0.0, %v1370
      %v1386 = vrot.slane %v1354, 1
      %v1387 = vrot.slane %v1355, 1
      %v1388 = vrot.slane %v1356, 1
      %v1389 = vrot.slane %v1357, 1
      %v1390 = vrot.slane %v1358, 1
      %v1391 = vrot.slane %v1359, 1
      %v1392 = vrot.slane %v1360, 1
      %v1393 = vrot.slane %v1361, 1
      %v1394 = vsel %vm655, %v1392, %v1393
      %v1395 = vsel %vm655, %v1391, %v1392
      %v1396 = vsel %vm655, %v1390, %v1391
      %v1397 = vsel %vm655, %v1389, %v1390
      %v1398 = vsel %vm655, %v1388, %v1389
      %v1399 = vsel %vm655, %v1387, %v1388
      %v1400 = vsel %vm655, %v1386, %v1387
      %v1401 = vsel %vm655, %v1393, %v1386
      %v1402 = vsel %vm665, 0.0, %v1400
      %v1403 = vsel %vm665, 0.0, %v1399
      %v1404 = vsel %vm665, 0.0, %v1398
      %v1405 = vsel %vm665, 0.0, %v1397
      %v1406 = vsel %vm665, 0.0, %v1396
      %v1407 = vsel %vm665, 0.0, %v1395
      %v1408 = vsel %vm665, 0.0, %v1394
      %v1409 = vsel %vm665, 0.0, %v1401
      %v1410 = vpack.c.bf16 %v1379, %v1378
      %v1411 = vpack.c.bf16 %v1381, %v1380
      %v1412 = vpack.c.bf16 %v1383, %v1382
      %v1413 = vpack.c.bf16 %v1385, %v1384
      %v1414 = vld [vmem:[%s6] sm:$0xf]
      %v1415 = vld [vmem:[%s6 + $0x4] sm:$0xf]
      %v1416 = vld [vmem:[%s6 + $0x8] sm:$0xf]
      %v1417 = vld [vmem:[%s6 + $0xc] sm:$0xf]
      %v1418 = vld [vmem:[%s6 + $0x10] sm:$0xf]
      %v1419 = vld [vmem:[%s6 + $0x14] sm:$0xf]
      %v1420 = vld [vmem:[%s6 + $0x18] sm:$0x1]
      %v1421 = vpack.c.bf16 %v1355, %v1354
      %v1422 = vpack.c.bf16 %v1357, %v1356
      %v1423 = vpack.c.bf16 %v1359, %v1358
      %v1424 = vpack.c.bf16 %v1361, %v1360
      %s1425 = scalar_lea.vmem %s6, 28
      %v1426 = vld [vmem:[%s1425] sm:$0xf]
      %v1427 = vld [vmem:[%s1425 + $0x4] sm:$0xf]
      %v1428 = vld [vmem:[%s1425 + $0x8] sm:$0xf]
      %v1429 = vld [vmem:[%s1425 + $0xc] sm:$0xf]
      %v1430 = vld [vmem:[%s1425 + $0x10] sm:$0xf]
      %v1431 = vld [vmem:[%s1425 + $0x14] sm:$0xf]
      %v1432 = vld [vmem:[%s1425 + $0x18] sm:$0x1]
      %v1440 = vunpack.c.l.b16 %v1426
      %v1441 = vunpack.c.l.b16 %v1427
      %v1442 = vunpack.c.l.b16 %v1428
      %v1443 = vunpack.c.l.b16 %v1429
      %v1444 = vunpack.c.l.b16 %v1430
      %v1445 = vunpack.c.l.b16 %v1431
      %v1446 = vunpack.c.l.b16 %v1432
      %v1447 = vpack.c.b16 %v1441, %v1440
      %v1448 = vpack.c.b16 %v1443, %v1442
      %v1449 = vpack.c.b16 %v1445, %v1444
      %v1450 = vpack.c.b16 %v1446, %v1446
      %vm1454 = vcmask 408576
      %v1456 = vsel %vm1454, %v1421, 0
      %v1459 = vsel %vm1454, %v1422, 0
      %v1462 = vsel %vm1454, %v1423, 0
      %v1465 = vsel %vm1454, %v1424, 0
      %vm1467 = vcmask 1040384
      %v1469 = vsel %vm1467, %v1450, 0
      %1471 = vmatprep.subr.bf16.mxu0 0
      %1472 = vmatpush1.bf16.msra.mxu0 %v1447
      %1473 = vmatprep.subr.bf16.mxu0 0
      %1474 = vmatpush1.bf16.msra.mxu0 %v1448
      %1475 = vmatprep.subr.bf16.mxu0 0
      %1476 = vmatpush1.bf16.msra.mxu0 %v1449
      %1477 = vmatprep.subr.bf16.mxu0 0
      %1478 = vmatpush1.bf16.msra.mxu0 %v1469
      %1479 = vmatprep.subr.bf16.mxu0 0
      %1480 = vmatpush1.bf16.msra.mxu0 0
      %1481 = vmatprep.subr.bf16.mxu0 0
      %1482 = vmatpush1.bf16.msra.mxu0 0
      %1483 = vmatprep.subr.bf16.mxu0 0
      %1484 = vmatpush1.bf16.msra.mxu0 0
      %1485 = vmatprep.subr.bf16.mxu0 0
      %1486 = vmatpush1.bf16.msra.mxu0 0
      %1487 = vmatprep.subr.bf16.mxu0 0
      %1488 = vmatpush1.bf16.msra.mxu0 0
      %1489 = vmatprep.subr.bf16.mxu0 0
      %1490 = vmatpush1.bf16.msra.mxu0 0
      %1491 = vmatprep.subr.bf16.mxu0 0
      %1492 = vmatpush1.bf16.msra.mxu0 0
      %1493 = vmatprep.subr.bf16.mxu0 0
      %1494 = vmatpush1.bf16.msra.mxu0 0
      %1495 = vmatprep.subr.bf16.mxu0 0
      %1496 = vmatpush1.bf16.msra.mxu0 0
      %1497 = vmatprep.subr.bf16.mxu0 0
      %1498 = vmatpush1.bf16.msra.mxu0 0
      %1499 = vmatprep.subr.bf16.mxu0 0
      %1500 = vmatpush1.bf16.msra.mxu0 0
      %1501 = vmatprep.subr.bf16.mxu0 0
      %1502 = vmatpush1.bf16.msra.mxu0 0
      %1503 = vmatprep.mubr.bf16.mxu0 0
      %1504 = vmatmul.mubr.bf16.gmra.mrb[0].mxu0 %v1456
      %v1505 = vpop.f32.mrb[0].mxu0
      %v1506 = vadd.f32 0.0, %v1505
      %v1507 = vpop.f32.mrb[0].mxu0
      %v1508 = vpop.f32.mrb[0].mxu0
      %v1509 = vadd.f32 0.0, %v1508
      %v1510 = vpop.f32.mrb[0].mxu0
      %1511 = vmatprep.mubr.bf16.mxu0 0
      %1512 = vmatmul.mubr.bf16.gmra.mrb[0].mxu0 %v1459
      %v1513 = vpop.f32.mrb[0].mxu0
      %v1514 = vadd.f32 0.0, %v1513
      %v1515 = vpop.f32.mrb[0].mxu0
      %v1516 = vpop.f32.mrb[0].mxu0
      %v1517 = vadd.f32 0.0, %v1516
      %v1518 = vpop.f32.mrb[0].mxu0
      %1519 = vmatprep.mubr.bf16.mxu0 0
      %1520 = vmatmul.mubr.bf16.gmra.mrb[0].mxu0 %v1462
      %v1521 = vpop.f32.mrb[0].mxu0
      %v1522 = vadd.f32 0.0, %v1521
      %v1523 = vpop.f32.mrb[0].mxu0
      %v1524 = vpop.f32.mrb[0].mxu0
      %v1525 = vadd.f32 0.0, %v1524
      %v1526 = vpop.f32.mrb[0].mxu0
      %1527 = vmatprep.mubr.bf16.mxu0 0
      %1528 = vmatmul.mubr.bf16.gmra.mrb[0].mxu0 %v1465
      %v1529 = vpop.f32.mrb[0].mxu0
      %v1530 = vadd.f32 0.0, %v1529
      %v1531 = vpop.f32.mrb[0].mxu0
      %v1532 = vpop.f32.mrb[0].mxu0
      %v1533 = vadd.f32 0.0, %v1532
      %v1534 = vpop.f32.mrb[0].mxu0
      %1535 = vdwg.mxu0
      %v1543 = vunpack.c.l.b16 %v1414
      %v1544 = vunpack.c.l.b16 %v1415
      %v1545 = vunpack.c.l.b16 %v1416
      %v1546 = vunpack.c.l.b16 %v1417
      %v1547 = vunpack.c.l.b16 %v1418
      %v1548 = vunpack.c.l.b16 %v1419
      %v1549 = vunpack.c.l.b16 %v1420
      %v1550 = vpack.c.b16 %v1544, %v1543
      %v1551 = vpack.c.b16 %v1546, %v1545
      %v1552 = vpack.c.b16 %v1548, %v1547
      %v1553 = vpack.c.b16 %v1549, %v1549
      %v1558 = vsel %vm1454, %v1410, 0
      %v1561 = vsel %vm1454, %v1411, 0
      %v1564 = vsel %vm1454, %v1412, 0
      %v1567 = vsel %vm1454, %v1413, 0
      %v1570 = vsel %vm1467, %v1553, 0
      %1572 = vmatprep.subr.bf16.mxu0 0
      %1573 = vmatpush1.bf16.msra.mxu0 %v1550
      %1574 = vmatprep.subr.bf16.mxu0 0
      %1575 = vmatpush1.bf16.msra.mxu0 %v1551
      %1576 = vmatprep.subr.bf16.mxu0 0
      %1577 = vmatpush1.bf16.msra.mxu0 %v1552
      %1578 = vmatprep.subr.bf16.mxu0 0
      %1579 = vmatpush1.bf16.msra.mxu0 %v1570
      %1580 = vmatprep.subr.bf16.mxu0 0
      %1581 = vmatpush1.bf16.msra.mxu0 0
      %1582 = vmatprep.subr.bf16.mxu0 0
      %1583 = vmatpush1.bf16.msra.mxu0 0
      %1584 = vmatprep.subr.bf16.mxu0 0
      %1585 = vmatpush1.bf16.msra.mxu0 0
      %1586 = vmatprep.subr.bf16.mxu0 0
      %1587 = vmatpush1.bf16.msra.mxu0 0
      %1588 = vmatprep.subr.bf16.mxu0 0
      %1589 = vmatpush1.bf16.msra.mxu0 0
      %1590 = vmatprep.subr.bf16.mxu0 0
      %1591 = vmatpush1.bf16.msra.mxu0 0
      %1592 = vmatprep.subr.bf16.mxu0 0
      %1593 = vmatpush1.bf16.msra.mxu0 0
      %1594 = vmatprep.subr.bf16.mxu0 0
      %1595 = vmatpush1.bf16.msra.mxu0 0
      %1596 = vmatprep.subr.bf16.mxu0 0
      %1597 = vmatpush1.bf16.msra.mxu0 0
      %1598 = vmatprep.subr.bf16.mxu0 0
      %1599 = vmatpush1.bf16.msra.mxu0 0
      %1600 = vmatprep.subr.bf16.mxu0 0
      %1601 = vmatpush1.bf16.msra.mxu0 0
      %1602 = vmatprep.subr.bf16.mxu0 0
      %1603 = vmatpush1.bf16.msra.mxu0 0
      %1604 = vmatprep.mubr.bf16.mxu0 0
      %1605 = vmatmul.mubr.bf16.gmra.mrb[0].mxu0 %v1558
      %v1606 = vpop.f32.mrb[0].mxu0
      %v1607 = vadd.f32 %v1506, %v1606
      %v1608 = vpop.f32.mrb[0].mxu0
      %v1609 = vpop.f32.mrb[0].mxu0
      %v1610 = vadd.f32 %v1509, %v1609
      %v1611 = vpop.f32.mrb[0].mxu0
      %1612 = vmatprep.mubr.bf16.mxu0 0
      %1613 = vmatmul.mubr.bf16.gmra.mrb[0].mxu0 %v1561
      %v1614 = vpop.f32.mrb[0].mxu0
      %v1615 = vadd.f32 %v1514, %v1614
      %v1616 = vpop.f32.mrb[0].mxu0
      %v1617 = vpop.f32.mrb[0].mxu0
      %v1618 = vadd.f32 %v1517, %v1617
      %v1619 = vpop.f32.mrb[0].mxu0
      %1620 = vmatprep.mubr.bf16.mxu0 0
      %1621 = vmatmul.mubr.bf16.gmra.mrb[0].mxu0 %v1564
      %v1622 = vpop.f32.mrb[0].mxu0
      %v1623 = vadd.f32 %v1522, %v1622
      %v1624 = vpop.f32.mrb[0].mxu0
      %v1625 = vpop.f32.mrb[0].mxu0
      %v1626 = vadd.f32 %v1525, %v1625
      %v1627 = vpop.f32.mrb[0].mxu0
      %1628 = vmatprep.mubr.bf16.mxu0 0
      %1629 = vmatmul.mubr.bf16.gmra.mrb[0].mxu0 %v1567
      %v1630 = vpop.f32.mrb[0].mxu0
      %v1631 = vadd.f32 %v1530, %v1630
      %v1632 = vpop.f32.mrb[0].mxu0
      %v1633 = vpop.f32.mrb[0].mxu0
      %v1634 = vadd.f32 %v1533, %v1633
      %v1635 = vpop.f32.mrb[0].mxu0
      %1636 = vdwg.mxu0
      %v1637 = vpack.c.bf16 %v1403, %v1402
      %v1638 = vpack.c.bf16 %v1405, %v1404
      %v1639 = vpack.c.bf16 %v1407, %v1406
      %v1640 = vpack.c.bf16 %v1409, %v1408
      %s1641 = scalar_lea.vmem %s6, 56
      %v1642 = vld [vmem:[%s1641] sm:$0xf]
      %v1643 = vld [vmem:[%s1641 + $0x4] sm:$0xf]
      %v1644 = vld [vmem:[%s1641 + $0x8] sm:$0xf]
      %v1645 = vld [vmem:[%s1641 + $0xc] sm:$0xf]
      %v1646 = vld [vmem:[%s1641 + $0x10] sm:$0xf]
      %v1647 = vld [vmem:[%s1641 + $0x14] sm:$0xf]
      %v1648 = vld [vmem:[%s1641 + $0x18] sm:$0x1]
      %v1656 = vunpack.c.l.b16 %v1642
      %v1657 = vunpack.c.l.b16 %v1643
      %v1658 = vunpack.c.l.b16 %v1644
      %v1659 = vunpack.c.l.b16 %v1645
      %v1660 = vunpack.c.l.b16 %v1646
      %v1661 = vunpack.c.l.b16 %v1647
      %v1662 = vunpack.c.l.b16 %v1648
      %v1663 = vpack.c.b16 %v1657, %v1656
      %v1664 = vpack.c.b16 %v1659, %v1658
      %v1665 = vpack.c.b16 %v1661, %v1660
      %v1666 = vpack.c.b16 %v1662, %v1662
      %v1671 = vsel %vm1454, %v1637, 0
      %v1674 = vsel %vm1454, %v1638, 0
      %v1677 = vsel %vm1454, %v1639, 0
      %v1680 = vsel %vm1454, %v1640, 0
      %v1683 = vsel %vm1467, %v1666, 0
      %1685 = vmatprep.subr.bf16.mxu0 0
      %1686 = vmatpush1.bf16.msra.mxu0 %v1663
      %1687 = vmatprep.subr.bf16.mxu0 0
      %1688 = vmatpush1.bf16.msra.mxu0 %v1664
      %1689 = vmatprep.subr.bf16.mxu0 0
      %1690 = vmatpush1.bf16.msra.mxu0 %v1665
      %1691 = vmatprep.subr.bf16.mxu0 0
      %1692 = vmatpush1.bf16.msra.mxu0 %v1683
      %1693 = vmatprep.subr.bf16.mxu0 0
      %1694 = vmatpush1.bf16.msra.mxu0 0
      %1695 = vmatprep.subr.bf16.mxu0 0
      %1696 = vmatpush1.bf16.msra.mxu0 0
      %1697 = vmatprep.subr.bf16.mxu0 0
      %1698 = vmatpush1.bf16.msra.mxu0 0
      %1699 = vmatprep.subr.bf16.mxu0 0
      %1700 = vmatpush1.bf16.msra.mxu0 0
      %1701 = vmatprep.subr.bf16.mxu0 0
      %1702 = vmatpush1.bf16.msra.mxu0 0
      %1703 = vmatprep.subr.bf16.mxu0 0
      %1704 = vmatpush1.bf16.msra.mxu0 0
      %1705 = vmatprep.subr.bf16.mxu0 0
      %1706 = vmatpush1.bf16.msra.mxu0 0
      %1707 = vmatprep.subr.bf16.mxu0 0
      %1708 = vmatpush1.bf16.msra.mxu0 0
      %1709 = vmatprep.subr.bf16.mxu0 0
      %1710 = vmatpush1.bf16.msra.mxu0 0
      %1711 = vmatprep.subr.bf16.mxu0 0
      %1712 = vmatpush1.bf16.msra.mxu0 0
      %1713 = vmatprep.subr.bf16.mxu0 0
      %1714 = vmatpush1.bf16.msra.mxu0 0
      %1715 = vmatprep.subr.bf16.mxu0 0
      %1716 = vmatpush1.bf16.msra.mxu0 0
      %1717 = vmatprep.mubr.bf16.mxu0 0
      %1718 = vmatmul.mubr.bf16.gmra.mrb[0].mxu0 %v1671
      %v1719 = vpop.f32.mrb[0].mxu0
      %v1720 = vadd.f32 0.0, %v1719
      %v1721 = vpop.f32.mrb[0].mxu0
      %v1722 = vpop.f32.mrb[0].mxu0
      %v1723 = vadd.f32 0.0, %v1722
      %v1724 = vpop.f32.mrb[0].mxu0
      %1725 = vmatprep.mubr.bf16.mxu0 0
      %1726 = vmatmul.mubr.bf16.gmra.mrb[0].mxu0 %v1674
      %v1727 = vpop.f32.mrb[0].mxu0
      %v1728 = vadd.f32 0.0, %v1727
      %v1729 = vpop.f32.mrb[0].mxu0
      %v1730 = vpop.f32.mrb[0].mxu0
      %v1731 = vadd.f32 0.0, %v1730
      %v1732 = vpop.f32.mrb[0].mxu0
      %1733 = vmatprep.mubr.bf16.mxu0 0
      %1734 = vmatmul.mubr.bf16.gmra.mrb[0].mxu0 %v1677
      %v1735 = vpop.f32.mrb[0].mxu0
      %v1736 = vadd.f32 0.0, %v1735
      %v1737 = vpop.f32.mrb[0].mxu0
      %v1738 = vpop.f32.mrb[0].mxu0
      %v1739 = vadd.f32 0.0, %v1738
      %v1740 = vpop.f32.mrb[0].mxu0
      %1741 = vmatprep.mubr.bf16.mxu0 0
      %1742 = vmatmul.mubr.bf16.gmra.mrb[0].mxu0 %v1680
      %v1743 = vpop.f32.mrb[0].mxu0
      %v1744 = vadd.f32 0.0, %v1743
      %v1745 = vpop.f32.mrb[0].mxu0
      %v1746 = vpop.f32.mrb[0].mxu0
      %v1747 = vadd.f32 0.0, %v1746
      %v1748 = vpop.f32.mrb[0].mxu0
      %1749 = vdwg.mxu0
      %v1750 = vadd.f32 %v1607, %v1720
      %v1751 = vadd.f32 %v1610, %v1723
      %v1752 = vadd.f32 %v1615, %v1728
      %v1753 = vadd.f32 %v1618, %v1731
      %v1754 = vadd.f32 %v1623, %v1736
      %v1755 = vadd.f32 %v1626, %v1739
      %v1756 = vadd.f32 %v1631, %v1744
      %v1757 = vadd.f32 %v1634, %v1747
      %v1758 = vld [vmem:[%s7] sm:$0x1]
      %v1760 = vlaneseq
      %v1761 = vshrl.u32 %v1760, 7
      %v1762 = vsub.s32 0, %v1761
      %v1763 = vrot.slane %v1758, %v1762
      %v1765 = vadd.f32 %v1750, %v1763
      %v1766 = vadd.f32 %v1751, %v1763
      %v1767 = vadd.f32 %v1752, %v1763
      %v1768 = vadd.f32 %v1753, %v1763
      %v1769 = vadd.f32 %v1754, %v1763
      %v1770 = vadd.f32 %v1755, %v1763
      %v1771 = vadd.f32 %v1756, %v1763
      %v1772 = vadd.f32 %v1757, %v1763
      %v1773 = vtanh.pop %v1765
      %v1774 = vtanh.pop %v1766
      %v1775 = vtanh.pop %v1767
      %v1776 = vtanh.pop %v1768
      %v1777 = vtanh.pop %v1769
      %v1778 = vtanh.pop %v1770
      %v1779 = vtanh.pop %v1771
      %v1780 = vtanh.pop %v1772
      %v1781 = vsel %vm1454, %v1773, -inf
      %v1782 = vrot.slane %v1781, 4
      %v1783 = vmax.f32 %v1781, %v1782
      %v1784 = vrot.slane %v1783, 2
      %v1785 = vmax.f32 %v1783, %v1784
      %v1786 = vrot.slane %v1785, 1
      %v1787 = vmax.f32 %v1785, %v1786
      %v1788 = vsel %vm1454, %v1774, -inf
      %v1789 = vrot.slane %v1788, 4
      %v1790 = vmax.f32 %v1788, %v1789
      %v1791 = vrot.slane %v1790, 2
      %v1792 = vmax.f32 %v1790, %v1791
      %v1793 = vrot.slane %v1792, 1
      %v1794 = vmax.f32 %v1792, %v1793
      %v1795 = vsel %vm1454, %v1775, -inf
      %v1796 = vrot.slane %v1795, 4
      %v1797 = vmax.f32 %v1795, %v1796
      %v1798 = vrot.slane %v1797, 2
      %v1799 = vmax.f32 %v1797, %v1798
      %v1800 = vrot.slane %v1799, 1
      %v1801 = vmax.f32 %v1799, %v1800
      %v1802 = vsel %vm1454, %v1776, -inf
      %v1803 = vrot.slane %v1802, 4
      %v1804 = vmax.f32 %v1802, %v1803
      %v1805 = vrot.slane %v1804, 2
      %v1806 = vmax.f32 %v1804, %v1805
      %v1807 = vrot.slane %v1806, 1
      %v1808 = vmax.f32 %v1806, %v1807
      %v1809 = vsel %vm1454, %v1777, -inf
      %v1810 = vrot.slane %v1809, 4
      %v1811 = vmax.f32 %v1809, %v1810
      %v1812 = vrot.slane %v1811, 2
      %v1813 = vmax.f32 %v1811, %v1812
      %v1814 = vrot.slane %v1813, 1
      %v1815 = vmax.f32 %v1813, %v1814
      %v1816 = vsel %vm1454, %v1778, -inf
      %v1817 = vrot.slane %v1816, 4
      %v1818 = vmax.f32 %v1816, %v1817
      %v1819 = vrot.slane %v1818, 2
      %v1820 = vmax.f32 %v1818, %v1819
      %v1821 = vrot.slane %v1820, 1
      %v1822 = vmax.f32 %v1820, %v1821
      %v1823 = vsel %vm1454, %v1779, -inf
      %v1824 = vrot.slane %v1823, 4
      %v1825 = vmax.f32 %v1823, %v1824
      %v1826 = vrot.slane %v1825, 2
      %v1827 = vmax.f32 %v1825, %v1826
      %v1828 = vrot.slane %v1827, 1
      %v1829 = vmax.f32 %v1827, %v1828
      %v1830 = vsel %vm1454, %v1780, -inf
      %v1831 = vrot.slane %v1830, 4
      %v1832 = vmax.f32 %v1830, %v1831
      %v1833 = vrot.slane %v1832, 2
      %v1834 = vmax.f32 %v1832, %v1833
      %v1835 = vrot.slane %v1834, 1
      %v1836 = vmax.f32 %v1834, %v1835
      %v1837 = vpack.c.bf16 %v1787, %v1787
      %v1838 = vpack.c.bf16 %v1794, %v1794
      %v1839 = vpack.c.bf16 %v1801, %v1801
      %v1840 = vpack.c.bf16 %v1808, %v1808
      %v1841 = vpack.c.bf16 %v1815, %v1815
      %v1842 = vpack.c.bf16 %v1822, %v1822
      %v1843 = vpack.c.bf16 %v1829, %v1829
      %v1844 = vpack.c.bf16 %v1836, %v1836
      %v1845 = vld [vmem:[%s8] sm:$0xf]
      %v1846 = vld [vmem:[%s8 + $0x4] sm:$0xf]
      %v1847 = vld [vmem:[%s8 + $0x8] sm:$0xf]
      %v1848 = vld [vmem:[%s8 + $0xc] sm:$0xf]
      %v1849 = vld [vmem:[%s8 + $0x10] sm:$0xf]
      %v1850 = vld [vmem:[%s8 + $0x14] sm:$0xf]
      %v1851 = vld [vmem:[%s8 + $0x18] sm:$0x1]
      %v1852 = vld [vmem:[%s9] sm:$0x1]
      %v1854 = vlaneseq
      %v1855 = vshrl.u32 %v1854, 7
      %v1856 = vsub.s32 0, %v1855
      %v1857 = vrot.slane %v1852, %v1856
      %v1867 = vunpack.c.l.b16 %v1837
      %v1868 = vunpack.c.l.b16 %v1838
      %v1869 = vunpack.c.l.b16 %v1839
      %v1870 = vunpack.c.l.b16 %v1840
      %v1871 = vunpack.c.l.b16 %v1841
      %v1872 = vunpack.c.l.b16 %v1842
      %v1873 = vunpack.c.l.b16 %v1843
      %v1874 = vunpack.c.l.b16 %v1844
      %vm1875 = vcmask 1041409
      %v1876 = vsel %vm1875, %v1868, %v1867
      %vm1877 = vcmask 1042434
      %v1878 = vsel %vm1877, %v1869, %v1876
      %vm1879 = vcmask 1043459
      %v1880 = vsel %vm1879, %v1870, %v1878
      %vm1881 = vcmask 1044484
      %v1882 = vsel %vm1881, %v1871, %v1880
      %vm1883 = vcmask 1045509
      %v1884 = vsel %vm1883, %v1872, %v1882
      %vm1885 = vcmask 1046534
      %v1886 = vsel %vm1885, %v1873, %v1884
      %vm1887 = vcmask 1047559
      %v1888 = vsel %vm1887, %v1874, %v1886
      %v1889 = vpack.c.b16 %v1888, %v1888
      %v1897 = vunpack.c.l.b16 %v1845
      %v1898 = vunpack.c.l.b16 %v1846
      %v1899 = vunpack.c.l.b16 %v1847
      %v1900 = vunpack.c.l.b16 %v1848
      %v1901 = vunpack.c.l.b16 %v1849
      %v1902 = vunpack.c.l.b16 %v1850
      %v1903 = vunpack.c.l.b16 %v1851
      %v1904 = vpack.c.b16 %v1898, %v1897
      %v1905 = vpack.c.b16 %v1900, %v1899
      %v1906 = vpack.c.b16 %v1902, %v1901
      %v1907 = vpack.c.b16 %v1903, %v1903
      %v1912 = vsel %vm1454, %v1889, 0
      %v1915 = vsel %vm1467, %v1907, 0
      %1917 = vmatprep.subr.bf16.mxu0 0
      %1918 = vmatpush1.bf16.msra.mxu0 %v1904
      %1919 = vmatprep.subr.bf16.mxu0 0
      %1920 = vmatpush1.bf16.msra.mxu0 %v1905
      %1921 = vmatprep.subr.bf16.mxu0 0
      %1922 = vmatpush1.bf16.msra.mxu0 %v1906
      %1923 = vmatprep.subr.bf16.mxu0 0
      %1924 = vmatpush1.bf16.msra.mxu0 %v1915
      %1925 = vmatprep.subr.bf16.mxu0 0
      %1926 = vmatpush1.bf16.msra.mxu0 0
      %1927 = vmatprep.subr.bf16.mxu0 0
      %1928 = vmatpush1.bf16.msra.mxu0 0
      %1929 = vmatprep.subr.bf16.mxu0 0
      %1930 = vmatpush1.bf16.msra.mxu0 0
      %1931 = vmatprep.subr.bf16.mxu0 0
      %1932 = vmatpush1.bf16.msra.mxu0 0
      %1933 = vmatprep.subr.bf16.mxu0 0
      %1934 = vmatpush1.bf16.msra.mxu0 0
      %1935 = vmatprep.subr.bf16.mxu0 0
      %1936 = vmatpush1.bf16.msra.mxu0 0
      %1937 = vmatprep.subr.bf16.mxu0 0
      %1938 = vmatpush1.bf16.msra.mxu0 0
      %1939 = vmatprep.subr.bf16.mxu0 0
      %1940 = vmatpush1.bf16.msra.mxu0 0
      %1941 = vmatprep.subr.bf16.mxu0 0
      %1942 = vmatpush1.bf16.msra.mxu0 0
      %1943 = vmatprep.subr.bf16.mxu0 0
      %1944 = vmatpush1.bf16.msra.mxu0 0
      %1945 = vmatprep.subr.bf16.mxu0 0
      %1946 = vmatpush1.bf16.msra.mxu0 0
      %1947 = vmatprep.subr.bf16.mxu0 0
      %1948 = vmatpush1.bf16.msra.mxu0 0
      %1949 = vmatprep.mubr.bf16.mxu0 0
      %1950 = vmatmul.mubr.bf16.gmra.mrb[0].mxu0 %v1912
      %v1951 = vpop.f32.mrb[0].mxu0
      %v1952 = vadd.f32 %v1857, %v1951
      %v1953 = vpop.f32.mrb[0].mxu0
      %v1954 = vpop.f32.mrb[0].mxu0
      %v1955 = vpop.f32.mrb[0].mxu0
      %1956 = vdwg.mxu0
      %v1957 = vtanh.pop %v1952
      %v1958 = vpack.c.bf16 %v1957, %v1957
      %v1959 = vld [vmem:[%s10] sm:$0xf]
      %v1960 = vld [vmem:[%s10 + $0x4] sm:$0xf]
      %v1961 = vld [vmem:[%s10 + $0x8] sm:$0x3]
      %v1962 = vld [vmem:[%s11] sm:$0x1]
      %v1964 = vlaneseq
      %v1965 = vshrl.u32 %v1964, 7
      %v1966 = vsub.s32 0, %v1965
      %v1967 = vrot.slane %v1962, %v1966
      %v1972 = vunpack.c.l.b16 %v1959
      %v1973 = vunpack.c.l.b16 %v1960
      %v1974 = vunpack.c.l.b16 %v1961
      %v1975 = vpack.c.b16 %v1973, %v1972
      %v1976 = vpack.c.b16 %v1974, %v1974
      %vm1978 = vcmask 162816
      %v1980 = vsel %vm1978, %v1958, 0
      %vm1982 = vcmask 1041408
      %v1984 = vsel %vm1982, %v1976, 0
      %1986 = vmatprep.subr.bf16.mxu0 0
      %1987 = vmatpush1.bf16.msra.mxu0 %v1975
      %1988 = vmatprep.subr.bf16.mxu0 0
      %1989 = vmatpush1.bf16.msra.mxu0 %v1984
      %1990 = vmatprep.subr.bf16.mxu0 0
      %1991 = vmatpush1.bf16.msra.mxu0 0
      %1992 = vmatprep.subr.bf16.mxu0 0
      %1993 = vmatpush1.bf16.msra.mxu0 0
      %1994 = vmatprep.subr.bf16.mxu0 0
      %1995 = vmatpush1.bf16.msra.mxu0 0
      %1996 = vmatprep.subr.bf16.mxu0 0
      %1997 = vmatpush1.bf16.msra.mxu0 0
      %1998 = vmatprep.subr.bf16.mxu0 0
      %1999 = vmatpush1.bf16.msra.mxu0 0
      %2000 = vmatprep.subr.bf16.mxu0 0
      %2001 = vmatpush1.bf16.msra.mxu0 0
      %2002 = vmatprep.subr.bf16.mxu0 0
      %2003 = vmatpush1.bf16.msra.mxu0 0
      %2004 = vmatprep.subr.bf16.mxu0 0
      %2005 = vmatpush1.bf16.msra.mxu0 0
      %2006 = vmatprep.subr.bf16.mxu0 0
      %2007 = vmatpush1.bf16.msra.mxu0 0
      %2008 = vmatprep.subr.bf16.mxu0 0
      %2009 = vmatpush1.bf16.msra.mxu0 0
      %2010 = vmatprep.subr.bf16.mxu0 0
      %2011 = vmatpush1.bf16.msra.mxu0 0
      %2012 = vmatprep.subr.bf16.mxu0 0
      %2013 = vmatpush1.bf16.msra.mxu0 0
      %2014 = vmatprep.subr.bf16.mxu0 0
      %2015 = vmatpush1.bf16.msra.mxu0 0
      %2016 = vmatprep.subr.bf16.mxu0 0
      %2017 = vmatpush1.bf16.msra.mxu0 0
      %2018 = vmatprep.mubr.bf16.mxu0 0
      %2019 = vmatmul.mubr.bf16.gmra.mrb[0].mxu0 %v1980
      %v2020 = vpop.f32.mrb[0].mxu0
      %v2021 = vadd.f32 %v1967, %v2020
      %v2022 = vpop.f32.mrb[0].mxu0
      %v2023 = vpop.f32.mrb[0].mxu0
      %v2024 = vpop.f32.mrb[0].mxu0
      %2025 = vdwg.mxu0
      %v2026 = vtanh.pop %v2021
      %vm2027 = vcmask 15360
      %v2028 = vsel %vm2027, %v2026, -inf
      %2029 = vmax.xlane.f32.xlu0 %v2028
      %v2030 = vpop.xlane.xlu0 %2029
      %v2031 = vsub.f32 %v2026, %v2030
      %v2032 = vmul.f32 %v2031, 1.442695
      %v2033 = vpow.pop %v2032
      %v2034 = vsel %vm2027, %v2033, 0.0
      %2035 = vadd.xlane.f32.xlu0 %v2034
      %v2036 = vpop.xlane.xlu0 %2035
      %v2037 = vlog2.pop %v2036
      %v2038 = vmul.f32 %v2037, 0.6931472
      %v2039 = vadd.f32 %v2030, %v2038
      %v2040 = vsub.f32 %v2026, %v2039
      %2041 = vst.msk [vmem:[%s435] sm:$0xff] %vm2027, %v2040
      %p2042 = scmp.lt.s32.totalorder %s23, 1
      %s2043 = scalar_select %p2042, %s23, 1
      %s2044 = smul.addr %s2043, 8
      %s2045 = scalar_lea.vmem %s12, %s2044
      // Predicated region
      $region69: #{tpu_custom_call.1} parent=67 // pred_check
        %p2046 = pneg %p303
      $region70: #{tpu_custom_call.1} parent=67 // pred_check_branch
        %2048 = sbr.rel (%p2046) target = $region72
      $region71: #{tpu_custom_call.1} parent=67 // pred_region
        _
      $region72: #{tpu_custom_call.1} parent=67 // pred_fallthru
        _
    $region68: #{tpu_custom_call.1} parent=5 // pred_fallthru
      _
    %p2049 = scmp.le.s32.totalorder 2, %s18
    // Predicated region
    $region73: #{tpu_custom_call.1} parent=5 // pred_check
      %p2050 = pneg %p2049
    $region74: #{tpu_custom_call.1} parent=5 // pred_check_branch
      %2052 = sbr.rel (%p2050) target = $region76
    $region75: #{tpu_custom_call.1} parent=5 // pred_region
      %s2053 = ssub.s32 %s18, 2
      // Predicated region
      $region77: #{tpu_custom_call.1} parent=75 // pred_check
        %p2054 = pneg %p309
      $region78: #{tpu_custom_call.1} parent=75 // pred_check_branch
        %2056 = sbr.rel (%p2054) target = $region80
      $region79: #{tpu_custom_call.1} parent=75 // pred_region
        %p2057 = scmp.lt.s32.totalorder %s24, 1
        %s2058 = scalar_select %p2057, %s24, 1
        %s2059 = smul.addr %s2058, 8
        %s2060 = scalar_lea.vmem %s12, %s2059
      $region80: #{tpu_custom_call.1} parent=75 // pred_fallthru
        _
    $region76: #{tpu_custom_call.1} parent=5 // pred_fallthru
      _
  $region6: #{tpu_custom_call.1} parent=0 // loop_footer
    %s22 = sadd.s32 1, %s18
  $region7: #{tpu_custom_call.1} parent=0 // loop_footer_branch
    %17 = sbr.rel target = $region3
  $region8: #{tpu_custom_call.1} parent=0 // loop_exit
    _

</llo_original>
